<compile_context>
chip_gen: v7x
topology: tpu7x:2x2x1
jax: 0.10.0
libtpu: 0.0.40
codegen_flags: <defaults>
</compile_context>

<pallas_src>
import jax
import jax.numpy as jnp
from jax import lax
from jax.experimental import pallas as pl
from jax.experimental.pallas import tpu as pltpu

LANE = 128
SUBLANE = 8
MIB = 1 << 20


def _round_up(n, m):
    return ((n + m - 1) // m) * m


def _pick_tile(total, candidates):
    for c in candidates:
        if total % c == 0:
            return c
    return total


# --------------------------------------------------------------------------
# Kernel A: single-layer tanh RNN recurrence (one batch block per program)
# --------------------------------------------------------------------------
def rnn_recurrence_kernel(emb_ref, h0_ref, wih_ref, whh_ref, bias_ref,
                          hs_ref, hN_ref, xw_scr, hs_scr):
    """RNN recurrence with the input projection hoisted out of the loop.

    emb_ref : (T, TB, E)   f32   time-major embedded inputs for this batch block
    h0_ref  : (TB, Hp)     f32   initial hidden state (lane-padded)
    wih_ref : (E, Hp)      bf16  = W_ih^T (padded)
    whh_ref : (Hp, Hp)     bf16  = W_hh^T (padded)
    bias_ref: (1, Hp)      f32   = b_ih + b_hh (padded)
    hs_ref  : (TB*T, Hp)   bf16  OUT hidden states, b-major rows (row = b*T + t)
    hN_ref  : (TB, Hp)     f32   OUT final hidden state
    xw_scr  : (T*TB, Hp)   f32   scratch: hoisted input projection (time-major)
    hs_scr  : (T, TB, Hp)  bf16  scratch: hidden states (time-major)
    """
    T, TB, E = emb_ref.shape

    # One batched bf16 MXU matmul for all timesteps, combined bias folded in
    # once, so the serial loop body carries only the (TB,Hp)x(Hp,Hp) matmul.
    x2 = emb_ref[...].reshape(T * TB, E).astype(jnp.bfloat16)
    xw_scr[...] = (jnp.dot(x2, wih_ref[...],
                           preferred_element_type=jnp.float32)
                   + bias_ref[...])
    whh = whh_ref[...]                       # bf16, stays resident in vregs

    def step(t, h_prev):                     # h_prev: (TB, Hp) f32 carry
        start = pl.multiple_of(t * TB, TB)
        pre = xw_scr[pl.ds(start, TB), :] + jnp.dot(
            h_prev.astype(jnp.bfloat16), whh,
            preferred_element_type=jnp.float32)
        h_new = jnp.tanh(pre)
        hs_scr[t] = h_new.astype(jnp.bfloat16)
        return h_new

    # Partial unroll: full for small T, capped so code size / vreg live
    # ranges stay bounded for long sequences.
    h_last = lax.fori_loop(0, T, step, h0_ref[...], unroll=min(T, 8))
    hN_ref[...] = h_last

    # Rearrange time-major -> b-major once with all-static slices, so the
    # wrapper never round-trips the hidden states through an XLA transpose.
    for bb in range(TB):
        hs_ref[pl.ds(bb * T, T), :] = hs_scr[:, bb, :]


# --------------------------------------------------------------------------
# Kernel B: tiled output projection (hidden states -> vocab logits)
# --------------------------------------------------------------------------
def projection_kernel(hs_ref, wl_ref, bl_ref, out_ref):
    """(TM, Hp) bf16 @ (Hp, TV) bf16 + bias(f32) -> lane-dense (TM, TV) f32."""
    out_ref[...] = (jnp.dot(hs_ref[...], wl_ref[...],
                            preferred_element_type=jnp.float32)
                    + bl_ref[...])


# --------------------------------------------------------------------------
# Parameter preparation and forward wrapper
# --------------------------------------------------------------------------
def prepare_params(p):
    """Transpose to x@W layout, fold biases, pad H/V to 128 lanes, bf16 weights."""
    H, E = p["w_ih"].shape              # PyTorch W_ih: (H, E)
    V = p["w_lin"].shape[0]             # PyTorch Linear weight: (V, H)
    Hp, Vp = _round_up(H, LANE), _round_up(V, LANE)
    f32, bf16 = jnp.float32, jnp.bfloat16
    w_ih = jnp.zeros((E, Hp), f32).at[:, :H].set(p["w_ih"].T).astype(bf16)
    w_hh = jnp.zeros((Hp, Hp), f32).at[:H, :H].set(p["w_hh"].T).astype(bf16)
    bias = jnp.zeros((1, Hp), f32).at[0, :H].set(p["b_ih"] + p["b_hh"])
    w_lin = jnp.zeros((Hp, Vp), f32).at[:H, :V].set(p["w_lin"].T).astype(bf16)
    b_lin = jnp.zeros((1, Vp), f32).at[0, :V].set(p["b_lin"])
    return {"embed": p["embed"].astype(f32), "w_ih": w_ih, "w_hh": w_hh,
            "bias": bias, "w_lin": w_lin, "b_lin": b_lin}


def _vmem_limit_a(T, TB, E, Hp):
    f32, bf16 = 4, 2
    b = 0
    b += 2 * T * TB * E * f32                 # emb block (double-buffered)
    b += 2 * TB * Hp * f32                    # h0
    b += 2 * (E * Hp + Hp * Hp) * bf16        # weights
    b += 2 * Hp * f32                         # bias
    b += 2 * TB * T * Hp * bf16               # hs out
    b += 2 * TB * Hp * f32                    # hN out
    b += T * TB * Hp * f32                    # xw scratch
    b += T * TB * Hp * bf16                   # hs scratch
    return int(min(48 * MIB, max(16 * MIB, 2 * b)))


def _vmem_limit_b(TM, TV, Hp):
    f32, bf16 = 4, 2
    b = 2 * (TM * Hp * bf16 + Hp * TV * bf16 + TV * f32 + TM * TV * f32)
    return int(min(48 * MIB, max(16 * MIB, 2 * b)))


@jax.jit
def rnnlm_forward(x_ids, h0, pp):
    """x_ids (B,T) int32; h0 (1,B,H) f32; pp = prepare_params(params).

    Returns (out (B*T, V) f32, h (1, B, H) f32), matching the PyTorch module.
    """
    B, T = x_ids.shape
    H = h0.shape[-1]
    V, E = pp["embed"].shape
    Hp = pp["w_hh"].shape[0]
    Vp = pp["w_lin"].shape[1]

    Bp = _round_up(B, SUBLANE)                # sublane-pad the batch
    TB = _pick_tile(Bp, (32, 16, 8))          # batch rows per Kernel-A program
    BT = B * T
    BTp = Bp * T

    # --- embedding gather (JAX glue) ----------------------------------------
    # NOTE: jnp.take clamps out-of-range ids whereas torch.nn.Embedding raises.
    # TODO(synk): fold the gather into Kernel A via scalar-prefetched ids + a
    # pl.Element row BlockSpec to avoid materializing emb in HBM.
    if Bp != B:
        x_ids_p = jnp.zeros((Bp, T), x_ids.dtype).at[:B].set(x_ids)
    else:
        x_ids_p = x_ids
    emb_tm = jnp.take(pp["embed"], x_ids_p.T, axis=0)        # (T, Bp, E) f32
    h0p = jnp.zeros((Bp, Hp), jnp.float32).at[:B, :H].set(h0[0])

    # --- Kernel A: recurrence, gridded over batch blocks ("parallel") -------
    hs_bm, hN = pl.pallas_call(
        rnn_recurrence_kernel,
        out_shape=(jax.ShapeDtypeStruct((BTp, Hp), jnp.bfloat16),
                   jax.ShapeDtypeStruct((Bp, Hp), jnp.float32)),
        grid_spec=pltpu.PrefetchScalarGridSpec(
            num_scalar_prefetch=0,
            grid=(Bp // TB,),
            in_specs=[pl.BlockSpec((T, TB, E), lambda b: (0, b, 0)),
                      pl.BlockSpec((TB, Hp), lambda b: (b, 0)),
                      pl.BlockSpec((E, Hp), lambda b: (0, 0)),
                      pl.BlockSpec((Hp, Hp), lambda b: (0, 0)),
                      pl.BlockSpec((1, Hp), lambda b: (0, 0))],
            out_specs=[pl.BlockSpec((TB * T, Hp), lambda b: (b, 0)),
                       pl.BlockSpec((TB, Hp), lambda b: (b, 0))],
            scratch_shapes=[pltpu.VMEM((T * TB, Hp), jnp.float32),
                            pltpu.VMEM((T, TB, Hp), jnp.bfloat16)]),
        compiler_params=pltpu.CompilerParams(
            dimension_semantics=("parallel",),
            vmem_limit_bytes=_vmem_limit_a(T, TB, E, Hp)),
    )(emb_tm, h0p, pp["w_ih"], pp["w_hh"], pp["bias"])
    # TODO(synk): for very large T*B or E, stream the hoisted input projection
    # (pltpu.emit_pipeline) instead of keeping the whole xw slab VMEM-resident.

    # --- Kernel B: tiled, pipelined output projection ------------------------
    TM = _pick_tile(BTp, (256, 128, 64, 32, 16, 8))
    TV = _pick_tile(Vp, (1024, 512, 256, 128))
    compiler_b = pltpu.CompilerParams(
        dimension_semantics=("parallel", "parallel"),
        vmem_limit_bytes=_vmem_limit_b(TM, TV, Hp))

    # Choose the grid order so the *re-streamed* operand costs less HBM traffic.
    restream_hs = (BTp * Hp) * (Vp // TV)     # vocab-outer: weight fetched once
    restream_w = (Hp * Vp) * (BTp // TM)      # rows-outer : hs fetched once
    if restream_hs <= restream_w:
        grid = (Vp // TV, BTp // TM)          # rows innermost: w_lin tile resident
        in_specs = [pl.BlockSpec((TM, Hp), lambda j, i: (i, 0)),
                    pl.BlockSpec((Hp, TV), lambda j, i: (0, j)),
                    pl.BlockSpec((1, TV), lambda j, i: (0, j))]
        out_spec = pl.BlockSpec((TM, TV), lambda j, i: (i, j))
    else:
        grid = (BTp // TM, Vp // TV)          # vocab innermost: hs tile resident
        in_specs = [pl.BlockSpec((TM, Hp), lambda i, j: (i, 0)),
                    pl.BlockSpec((Hp, TV), lambda i, j: (0, j)),
                    pl.BlockSpec((1, TV), lambda i, j: (0, j))]
        out_spec = pl.BlockSpec((TM, TV), lambda i, j: (i, j))

    out_p = pl.pallas_call(
        projection_kernel,
        out_shape=jax.ShapeDtypeStruct((BTp, Vp), jnp.float32),
        grid_spec=pltpu.PrefetchScalarGridSpec(
            num_scalar_prefetch=0, grid=grid,
            in_specs=in_specs, out_specs=out_spec),
        compiler_params=compiler_b,
    )(hs_bm, pp["w_lin"], pp["b_lin"])

    # Logits already in PyTorch row order (row = b*T + t); only slice off the
    # padding when it was actually added (the slice is an extra HBM copy).
    out = out_p if (BTp == BT and Vp == V) else out_p[:BT, :V]
    h = hN[:B, :H][None, :, :]                # (1, B, H)
    return out, h


def init_params(key, vocab_size, embed_size, hidden_size):
    """Parameters in PyTorch layout (W_ih (H,E), W_hh (H,H), W_lin (V,H))."""
    ks = jax.random.split(key, 7)
    s = 1.0 / jnp.sqrt(hidden_size)
    u = lambda k, shape: jax.random.uniform(k, shape, jnp.float32, -s, s)
    return {
        "embed": jax.random.normal(ks[0], (vocab_size, embed_size), jnp.float32),
        "w_ih": u(ks[1], (hidden_size, embed_size)),
        "w_hh": u(ks[2], (hidden_size, hidden_size)),
        "b_ih": u(ks[3], (hidden_size,)),
        "b_hh": u(ks[4], (hidden_size,)),
        "w_lin": u(ks[5], (vocab_size, hidden_size)),
        "b_lin": u(ks[6], (vocab_size,)),
    }


if __name__ == "__main__":
    # TODO(synk): only the method='RNN' (tanh) branch is implemented; GRU is not.
    vocab_size, embed_size, hidden_size, num_layers = 64, 8, 32, 1
    B, T = 2, 8

    key = jax.random.PRNGKey(0)
    k_param, k_x = jax.random.split(key)
    params = init_params(k_param, vocab_size, embed_size, hidden_size)
    pp = prepare_params(params)

    x_ids = jax.random.randint(k_x, (B, T), 0, vocab_size, dtype=jnp.int32)
    h0 = jnp.zeros((num_layers, B, hidden_size), jnp.float32)

    out, h = rnnlm_forward(x_ids, h0, pp)
    out = jax.block_until_ready(out)
    h = jax.block_until_ready(h)

    assert out.shape == (B * T, vocab_size), out.shape
    assert h.shape == (num_layers, B, hidden_size), h.shape
    assert bool(jnp.all(jnp.isfinite(out))) and bool(jnp.all(jnp.isfinite(h)))

    # Cross-check against a pure-JAX f32 reference of the same math (PyTorch
    # layout).  Kernels use bf16 matmul operands (f32 accumulate), so the
    # tolerance is loosened relative to a bit-exact f32 comparison.
    def ref_forward(x_ids, h0, p):
        emb = jnp.take(p["embed"], x_ids, axis=0)            # (B, T, E)

        def step(hh, x_t):
            h_new = jnp.tanh(x_t @ p["w_ih"].T + p["b_ih"]
                             + hh @ p["w_hh"].T + p["b_hh"])
            return h_new, h_new

        hN_, hs = lax.scan(step, h0[0], jnp.transpose(emb, (1, 0, 2)))
        outs = jnp.transpose(hs, (1, 0, 2)).reshape(B * T, hidden_size)
        return outs @ p["w_lin"].T + p["b_lin"], hN_[None]

    out_ref, h_ref = ref_forward(x_ids, h0, params)
    assert jnp.allclose(out, out_ref, atol=2e-2, rtol=2e-2)
    assert jnp.allclose(h, h_ref, atol=2e-2, rtol=2e-2)

    print("KERNEL_OK")
</pallas_src>

<mosaic_0001>
module attributes {stable_mosaic.version = 11 : i64} {
  func.func @rnn_recurrence_kernel(%arg0: i32, %arg1: memref<8x8x8xf32, #tpu.memory_space<vmem>>, %arg2: memref<8x128xf32, #tpu.memory_space<vmem>>, %arg3: memref<8x128xbf16, #tpu.memory_space<vmem>>, %arg4: memref<128x128xbf16, #tpu.memory_space<vmem>>, %arg5: memref<1x128xf32, #tpu.memory_space<vmem>>, %arg6: memref<64x128xbf16, #tpu.memory_space<vmem>>, %arg7: memref<8x128xf32, #tpu.memory_space<vmem>>, %arg8: memref<64x128xf32, #tpu.memory_space<vmem>>, %arg9: memref<8x8x128xbf16, #tpu.memory_space<vmem>>) attributes {dimension_semantics = [#tpu.dimension_semantics<parallel>], iteration_bounds = array<i64: 1>, scalar_prefetch = 0 : i64, scratch_operands = 2 : i64, tpu.core_type = #tpu.core_type<tc>, window_params = [{transform_indices = @transform_0, window_bounds = array<i64: 8, 8, 8>}, {transform_indices = @transform_1, window_bounds = array<i64: 8, 128>}, {pipeline_mode = #tpu.pipeline_mode<synchronous>, transform_indices = @transform_2, window_bounds = array<i64: 8, 128>}, {pipeline_mode = #tpu.pipeline_mode<synchronous>, transform_indices = @transform_3, window_bounds = array<i64: 128, 128>}, {pipeline_mode = #tpu.pipeline_mode<synchronous>, transform_indices = @transform_4, window_bounds = array<i64: 1, 128>}, {transform_indices = @transform_5, window_bounds = array<i64: 64, 128>}, {transform_indices = @transform_6, window_bounds = array<i64: 8, 128>}]} {
    %c0 = arith.constant 0 : index
    %c0_0 = arith.constant 0 : index
    %c0_1 = arith.constant 0 : index
    %0 = vector.load %arg1[%c0, %c0_0, %c0_1] : memref<8x8x8xf32, #tpu.memory_space<vmem>>, vector<8x8x8xf32>
    %1 = vector.shape_cast %0 : vector<8x8x8xf32> to vector<64x8xf32>
    %2 = arith.truncf %1 : vector<64x8xf32> to vector<64x8xbf16>
    %c0_2 = arith.constant 0 : index
    %c0_3 = arith.constant 0 : index
    %3 = vector.load %arg3[%c0_2, %c0_3] : memref<8x128xbf16, #tpu.memory_space<vmem>>, vector<8x128xbf16>
    %cst = arith.constant dense<0.000000e+00> : vector<64x128xf32>
    %4 = tpu.matmul %2, %3, %cst {dimension_numbers = #tpu.dot_dimension_numbers<[1], [0], [0], [1], [0, 0, 1, 1], [], []>} : vector<64x8xbf16>, vector<8x128xbf16>, vector<64x128xf32> -> vector<64x128xf32>
    %c0_4 = arith.constant 0 : index
    %c0_5 = arith.constant 0 : index
    %5 = vector.load %arg5[%c0_4, %c0_5] : memref<1x128xf32, #tpu.memory_space<vmem>>, vector<1x128xf32>
    %6 = vector.broadcast %5 : vector<1x128xf32> to vector<64x128xf32>
    %7 = arith.addf %4, %6 : vector<64x128xf32>
    %c0_6 = arith.constant 0 : index
    %c0_7 = arith.constant 0 : index
    %8 = vector.load %arg8[%c0_6, %c0_7] : memref<64x128xf32, #tpu.memory_space<vmem>>, vector<64x128xf32>
    tpu.vector_store %arg8[%c0_6, %c0_7], %7 {strides = array<i32>} : memref<64x128xf32, #tpu.memory_space<vmem>>, vector<64x128xf32>,
    %c0_8 = arith.constant 0 : index
    %c0_9 = arith.constant 0 : index
    %9 = vector.load %arg4[%c0_8, %c0_9] : memref<128x128xbf16, #tpu.memory_space<vmem>>, vector<128x128xbf16>
    %c0_10 = arith.constant 0 : index
    %c0_11 = arith.constant 0 : index
    %10 = vector.load %arg2[%c0_10, %c0_11] : memref<8x128xf32, #tpu.memory_space<vmem>>, vector<8x128xf32>
    %c0_i32 = arith.constant 0 : i32
    %c8_i32 = arith.constant 8 : i32
    %11 = arith.muli %c0_i32, %c8_i32 : i32
    %12 = tpu.assume_multiple %11, 8 : i32
    %13 = arith.index_cast %12 : i32 to index
    %c0_12 = arith.constant 0 : index
    %14 = vector.load %arg8[%13, %c0_12] : memref<64x128xf32, #tpu.memory_space<vmem>>, vector<8x128xf32>
    %15 = arith.truncf %10 : vector<8x128xf32> to vector<8x128xbf16>
    %cst_13 = arith.constant dense<0.000000e+00> : vector<8x128xf32>
    %16 = tpu.matmul %15, %9, %cst_13 {dimension_numbers = #tpu.dot_dimension_numbers<[1], [0], [0], [1], [0, 0, 1, 1], [], []>} : vector<8x128xbf16>, vector<128x128xbf16>, vector<8x128xf32> -> vector<8x128xf32>
    %17 = arith.addf %14, %16 : vector<8x128xf32>
    %18 = math.tanh %17 : vector<8x128xf32>
    %19 = arith.truncf %18 : vector<8x128xf32> to vector<8x128xbf16>
    %20 = arith.index_cast %c0_i32 : i32 to index
    %c0_14 = arith.constant 0 : index
    %c0_15 = arith.constant 0 : index
    %21 = vector.load %arg9[%20, %c0_14, %c0_15] : memref<8x8x128xbf16, #tpu.memory_space<vmem>>, vector<1x8x128xbf16>
    %22 = vector.shape_cast %21 : vector<1x8x128xbf16> to vector<8x128xbf16>
    %23 = vector.shape_cast %19 : vector<8x128xbf16> to vector<1x8x128xbf16>
    tpu.vector_store %arg9[%20, %c0_14, %c0_15], %23 {strides = array<i32>} : memref<8x8x128xbf16, #tpu.memory_space<vmem>>, vector<1x8x128xbf16>,
    %c1_i32 = arith.constant 1 : i32
    %c8_i32_16 = arith.constant 8 : i32
    %24 = arith.muli %c1_i32, %c8_i32_16 : i32
    %25 = tpu.assume_multiple %24, 8 : i32
    %26 = arith.index_cast %25 : i32 to index
    %c0_17 = arith.constant 0 : index
    %27 = vector.load %arg8[%26, %c0_17] : memref<64x128xf32, #tpu.memory_space<vmem>>, vector<8x128xf32>
    %28 = arith.truncf %18 : vector<8x128xf32> to vector<8x128xbf16>
    %cst_18 = arith.constant dense<0.000000e+00> : vector<8x128xf32>
    %29 = tpu.matmul %28, %9, %cst_18 {dimension_numbers = #tpu.dot_dimension_numbers<[1], [0], [0], [1], [0, 0, 1, 1], [], []>} : vector<8x128xbf16>, vector<128x128xbf16>, vector<8x128xf32> -> vector<8x128xf32>
    %30 = arith.addf %27, %29 : vector<8x128xf32>
    %31 = math.tanh %30 : vector<8x128xf32>
    %32 = arith.truncf %31 : vector<8x128xf32> to vector<8x128xbf16>
    %33 = arith.index_cast %c1_i32 : i32 to index
    %c0_19 = arith.constant 0 : index
    %c0_20 = arith.constant 0 : index
    %34 = vector.load %arg9[%33, %c0_19, %c0_20] : memref<8x8x128xbf16, #tpu.memory_space<vmem>>, vector<1x8x128xbf16>
    %35 = vector.shape_cast %34 : vector<1x8x128xbf16> to vector<8x128xbf16>
    %36 = vector.shape_cast %32 : vector<8x128xbf16> to vector<1x8x128xbf16>
    tpu.vector_store %arg9[%33, %c0_19, %c0_20], %36 {strides = array<i32>} : memref<8x8x128xbf16, #tpu.memory_space<vmem>>, vector<1x8x128xbf16>,
    %c2_i32 = arith.constant 2 : i32
    %c8_i32_21 = arith.constant 8 : i32
    %37 = arith.muli %c2_i32, %c8_i32_21 : i32
    %38 = tpu.assume_multiple %37, 8 : i32
    %39 = arith.index_cast %38 : i32 to index
    %c0_22 = arith.constant 0 : index
    %40 = vector.load %arg8[%39, %c0_22] : memref<64x128xf32, #tpu.memory_space<vmem>>, vector<8x128xf32>
    %41 = arith.truncf %31 : vector<8x128xf32> to vector<8x128xbf16>
    %cst_23 = arith.constant dense<0.000000e+00> : vector<8x128xf32>
    %42 = tpu.matmul %41, %9, %cst_23 {dimension_numbers = #tpu.dot_dimension_numbers<[1], [0], [0], [1], [0, 0, 1, 1], [], []>} : vector<8x128xbf16>, vector<128x128xbf16>, vector<8x128xf32> -> vector<8x128xf32>
    %43 = arith.addf %40, %42 : vector<8x128xf32>
    %44 = math.tanh %43 : vector<8x128xf32>
    %45 = arith.truncf %44 : vector<8x128xf32> to vector<8x128xbf16>
    %46 = arith.index_cast %c2_i32 : i32 to index
    %c0_24 = arith.constant 0 : index
    %c0_25 = arith.constant 0 : index
    %47 = vector.load %arg9[%46, %c0_24, %c0_25] : memref<8x8x128xbf16, #tpu.memory_space<vmem>>, vector<1x8x128xbf16>
    %48 = vector.shape_cast %47 : vector<1x8x128xbf16> to vector<8x128xbf16>
    %49 = vector.shape_cast %45 : vector<8x128xbf16> to vector<1x8x128xbf16>
    tpu.vector_store %arg9[%46, %c0_24, %c0_25], %49 {strides = array<i32>} : memref<8x8x128xbf16, #tpu.memory_space<vmem>>, vector<1x8x128xbf16>,
    %c3_i32 = arith.constant 3 : i32
    %c8_i32_26 = arith.constant 8 : i32
    %50 = arith.muli %c3_i32, %c8_i32_26 : i32
    %51 = tpu.assume_multiple %50, 8 : i32
    %52 = arith.index_cast %51 : i32 to index
    %c0_27 = arith.constant 0 : index
    %53 = vector.load %arg8[%52, %c0_27] : memref<64x128xf32, #tpu.memory_space<vmem>>, vector<8x128xf32>
    %54 = arith.truncf %44 : vector<8x128xf32> to vector<8x128xbf16>
    %cst_28 = arith.constant dense<0.000000e+00> : vector<8x128xf32>
    %55 = tpu.matmul %54, %9, %cst_28 {dimension_numbers = #tpu.dot_dimension_numbers<[1], [0], [0], [1], [0, 0, 1, 1], [], []>} : vector<8x128xbf16>, vector<128x128xbf16>, vector<8x128xf32> -> vector<8x128xf32>
    %56 = arith.addf %53, %55 : vector<8x128xf32>
    %57 = math.tanh %56 : vector<8x128xf32>
    %58 = arith.truncf %57 : vector<8x128xf32> to vector<8x128xbf16>
    %59 = arith.index_cast %c3_i32 : i32 to index
    %c0_29 = arith.constant 0 : index
    %c0_30 = arith.constant 0 : index
    %60 = vector.load %arg9[%59, %c0_29, %c0_30] : memref<8x8x128xbf16, #tpu.memory_space<vmem>>, vector<1x8x128xbf16>
    %61 = vector.shape_cast %60 : vector<1x8x128xbf16> to vector<8x128xbf16>
    %62 = vector.shape_cast %58 : vector<8x128xbf16> to vector<1x8x128xbf16>
    tpu.vector_store %arg9[%59, %c0_29, %c0_30], %62 {strides = array<i32>} : memref<8x8x128xbf16, #tpu.memory_space<vmem>>, vector<1x8x128xbf16>,
    %c4_i32 = arith.constant 4 : i32
    %c8_i32_31 = arith.constant 8 : i32
    %63 = arith.muli %c4_i32, %c8_i32_31 : i32
    %64 = tpu.assume_multiple %63, 8 : i32
    %65 = arith.index_cast %64 : i32 to index
    %c0_32 = arith.constant 0 : index
    %66 = vector.load %arg8[%65, %c0_32] : memref<64x128xf32, #tpu.memory_space<vmem>>, vector<8x128xf32>
    %67 = arith.truncf %57 : vector<8x128xf32> to vector<8x128xbf16>
    %cst_33 = arith.constant dense<0.000000e+00> : vector<8x128xf32>
    %68 = tpu.matmul %67, %9, %cst_33 {dimension_numbers = #tpu.dot_dimension_numbers<[1], [0], [0], [1], [0, 0, 1, 1], [], []>} : vector<8x128xbf16>, vector<128x128xbf16>, vector<8x128xf32> -> vector<8x128xf32>
    %69 = arith.addf %66, %68 : vector<8x128xf32>
    %70 = math.tanh %69 : vector<8x128xf32>
    %71 = arith.truncf %70 : vector<8x128xf32> to vector<8x128xbf16>
    %72 = arith.index_cast %c4_i32 : i32 to index
    %c0_34 = arith.constant 0 : index
    %c0_35 = arith.constant 0 : index
    %73 = vector.load %arg9[%72, %c0_34, %c0_35] : memref<8x8x128xbf16, #tpu.memory_space<vmem>>, vector<1x8x128xbf16>
    %74 = vector.shape_cast %73 : vector<1x8x128xbf16> to vector<8x128xbf16>
    %75 = vector.shape_cast %71 : vector<8x128xbf16> to vector<1x8x128xbf16>
    tpu.vector_store %arg9[%72, %c0_34, %c0_35], %75 {strides = array<i32>} : memref<8x8x128xbf16, #tpu.memory_space<vmem>>, vector<1x8x128xbf16>,
    %c5_i32 = arith.constant 5 : i32
    %c8_i32_36 = arith.constant 8 : i32
    %76 = arith.muli %c5_i32, %c8_i32_36 : i32
    %77 = tpu.assume_multiple %76, 8 : i32
    %78 = arith.index_cast %77 : i32 to index
    %c0_37 = arith.constant 0 : index
    %79 = vector.load %arg8[%78, %c0_37] : memref<64x128xf32, #tpu.memory_space<vmem>>, vector<8x128xf32>
    %80 = arith.truncf %70 : vector<8x128xf32> to vector<8x128xbf16>
    %cst_38 = arith.constant dense<0.000000e+00> : vector<8x128xf32>
    %81 = tpu.matmul %80, %9, %cst_38 {dimension_numbers = #tpu.dot_dimension_numbers<[1], [0], [0], [1], [0, 0, 1, 1], [], []>} : vector<8x128xbf16>, vector<128x128xbf16>, vector<8x128xf32> -> vector<8x128xf32>
    %82 = arith.addf %79, %81 : vector<8x128xf32>
    %83 = math.tanh %82 : vector<8x128xf32>
    %84 = arith.truncf %83 : vector<8x128xf32> to vector<8x128xbf16>
    %85 = arith.index_cast %c5_i32 : i32 to index
    %c0_39 = arith.constant 0 : index
    %c0_40 = arith.constant 0 : index
    %86 = vector.load %arg9[%85, %c0_39, %c0_40] : memref<8x8x128xbf16, #tpu.memory_space<vmem>>, vector<1x8x128xbf16>
    %87 = vector.shape_cast %86 : vector<1x8x128xbf16> to vector<8x128xbf16>
    %88 = vector.shape_cast %84 : vector<8x128xbf16> to vector<1x8x128xbf16>
    tpu.vector_store %arg9[%85, %c0_39, %c0_40], %88 {strides = array<i32>} : memref<8x8x128xbf16, #tpu.memory_space<vmem>>, vector<1x8x128xbf16>,
    %c6_i32 = arith.constant 6 : i32
    %c8_i32_41 = arith.constant 8 : i32
    %89 = arith.muli %c6_i32, %c8_i32_41 : i32
    %90 = tpu.assume_multiple %89, 8 : i32
    %91 = arith.index_cast %90 : i32 to index
    %c0_42 = arith.constant 0 : index
    %92 = vector.load %arg8[%91, %c0_42] : memref<64x128xf32, #tpu.memory_space<vmem>>, vector<8x128xf32>
    %93 = arith.truncf %83 : vector<8x128xf32> to vector<8x128xbf16>
    %cst_43 = arith.constant dense<0.000000e+00> : vector<8x128xf32>
    %94 = tpu.matmul %93, %9, %cst_43 {dimension_numbers = #tpu.dot_dimension_numbers<[1], [0], [0], [1], [0, 0, 1, 1], [], []>} : vector<8x128xbf16>, vector<128x128xbf16>, vector<8x128xf32> -> vector<8x128xf32>
    %95 = arith.addf %92, %94 : vector<8x128xf32>
    %96 = math.tanh %95 : vector<8x128xf32>
    %97 = arith.truncf %96 : vector<8x128xf32> to vector<8x128xbf16>
    %98 = arith.index_cast %c6_i32 : i32 to index
    %c0_44 = arith.constant 0 : index
    %c0_45 = arith.constant 0 : index
    %99 = vector.load %arg9[%98, %c0_44, %c0_45] : memref<8x8x128xbf16, #tpu.memory_space<vmem>>, vector<1x8x128xbf16>
    %100 = vector.shape_cast %99 : vector<1x8x128xbf16> to vector<8x128xbf16>
    %101 = vector.shape_cast %97 : vector<8x128xbf16> to vector<1x8x128xbf16>
    tpu.vector_store %arg9[%98, %c0_44, %c0_45], %101 {strides = array<i32>} : memref<8x8x128xbf16, #tpu.memory_space<vmem>>, vector<1x8x128xbf16>,
    %c7_i32 = arith.constant 7 : i32
    %c8_i32_46 = arith.constant 8 : i32
    %102 = arith.muli %c7_i32, %c8_i32_46 : i32
    %103 = tpu.assume_multiple %102, 8 : i32
    %104 = arith.index_cast %103 : i32 to index
    %c0_47 = arith.constant 0 : index
    %105 = vector.load %arg8[%104, %c0_47] : memref<64x128xf32, #tpu.memory_space<vmem>>, vector<8x128xf32>
    %106 = arith.truncf %96 : vector<8x128xf32> to vector<8x128xbf16>
    %cst_48 = arith.constant dense<0.000000e+00> : vector<8x128xf32>
    %107 = tpu.matmul %106, %9, %cst_48 {dimension_numbers = #tpu.dot_dimension_numbers<[1], [0], [0], [1], [0, 0, 1, 1], [], []>} : vector<8x128xbf16>, vector<128x128xbf16>, vector<8x128xf32> -> vector<8x128xf32>
    %108 = arith.addf %105, %107 : vector<8x128xf32>
    %109 = math.tanh %108 : vector<8x128xf32>
    %110 = arith.truncf %109 : vector<8x128xf32> to vector<8x128xbf16>
    %111 = arith.index_cast %c7_i32 : i32 to index
    %c0_49 = arith.constant 0 : index
    %c0_50 = arith.constant 0 : index
    %112 = vector.load %arg9[%111, %c0_49, %c0_50] : memref<8x8x128xbf16, #tpu.memory_space<vmem>>, vector<1x8x128xbf16>
    %113 = vector.shape_cast %112 : vector<1x8x128xbf16> to vector<8x128xbf16>
    %114 = vector.shape_cast %110 : vector<8x128xbf16> to vector<1x8x128xbf16>
    tpu.vector_store %arg9[%111, %c0_49, %c0_50], %114 {strides = array<i32>} : memref<8x8x128xbf16, #tpu.memory_space<vmem>>, vector<1x8x128xbf16>,
    %c8_i32_51 = arith.constant 8 : i32
    %c0_52 = arith.constant 0 : index
    %c0_53 = arith.constant 0 : index
    %115 = vector.load %arg7[%c0_52, %c0_53] : memref<8x128xf32, #tpu.memory_space<vmem>>, vector<8x128xf32>
    tpu.vector_store %arg7[%c0_52, %c0_53], %109 {strides = array<i32>} : memref<8x128xf32, #tpu.memory_space<vmem>>, vector<8x128xf32>,
    %c0_54 = arith.constant 0 : index
    %c0_55 = arith.constant 0 : index
    %c0_56 = arith.constant 0 : index
    %116 = vector.load %arg9[%c0_54, %c0_55, %c0_56] : memref<8x8x128xbf16, #tpu.memory_space<vmem>>, vector<8x1x128xbf16>
    %117 = vector.shape_cast %116 : vector<8x1x128xbf16> to vector<8x128xbf16>
    %c0_57 = arith.constant 0 : index
    %c0_58 = arith.constant 0 : index
    %118 = vector.load %arg6[%c0_57, %c0_58] : memref<64x128xbf16, #tpu.memory_space<vmem>>, vector<8x128xbf16>
    tpu.vector_store %arg6[%c0_57, %c0_58], %117 {strides = array<i32>} : memref<64x128xbf16, #tpu.memory_space<vmem>>, vector<8x128xbf16>,
    %c0_59 = arith.constant 0 : index
    %c1 = arith.constant 1 : index
    %c0_60 = arith.constant 0 : index
    %119 = vector.load %arg9[%c0_59, %c1, %c0_60] : memref<8x8x128xbf16, #tpu.memory_space<vmem>>, vector<8x1x128xbf16>
    %120 = vector.shape_cast %119 : vector<8x1x128xbf16> to vector<8x128xbf16>
    %c8 = arith.constant 8 : index
    %c0_61 = arith.constant 0 : index
    %121 = vector.load %arg6[%c8, %c0_61] : memref<64x128xbf16, #tpu.memory_space<vmem>>, vector<8x128xbf16>
    tpu.vector_store %arg6[%c8, %c0_61], %120 {strides = array<i32>} : memref<64x128xbf16, #tpu.memory_space<vmem>>, vector<8x128xbf16>,
    %c0_62 = arith.constant 0 : index
    %c2 = arith.constant 2 : index
    %c0_63 = arith.constant 0 : index
    %122 = vector.load %arg9[%c0_62, %c2, %c0_63] : memref<8x8x128xbf16, #tpu.memory_space<vmem>>, vector<8x1x128xbf16>
    %123 = vector.shape_cast %122 : vector<8x1x128xbf16> to vector<8x128xbf16>
    %c16 = arith.constant 16 : index
    %c0_64 = arith.constant 0 : index
    %124 = vector.load %arg6[%c16, %c0_64] : memref<64x128xbf16, #tpu.memory_space<vmem>>, vector<8x128xbf16>
    tpu.vector_store %arg6[%c16, %c0_64], %123 {strides = array<i32>} : memref<64x128xbf16, #tpu.memory_space<vmem>>, vector<8x128xbf16>,
    %c0_65 = arith.constant 0 : index
    %c3 = arith.constant 3 : index
    %c0_66 = arith.constant 0 : index
    %125 = vector.load %arg9[%c0_65, %c3, %c0_66] : memref<8x8x128xbf16, #tpu.memory_space<vmem>>, vector<8x1x128xbf16>
    %126 = vector.shape_cast %125 : vector<8x1x128xbf16> to vector<8x128xbf16>
    %c24 = arith.constant 24 : index
    %c0_67 = arith.constant 0 : index
    %127 = vector.load %arg6[%c24, %c0_67] : memref<64x128xbf16, #tpu.memory_space<vmem>>, vector<8x128xbf16>
    tpu.vector_store %arg6[%c24, %c0_67], %126 {strides = array<i32>} : memref<64x128xbf16, #tpu.memory_space<vmem>>, vector<8x128xbf16>,
    %c0_68 = arith.constant 0 : index
    %c4 = arith.constant 4 : index
    %c0_69 = arith.constant 0 : index
    %128 = vector.load %arg9[%c0_68, %c4, %c0_69] : memref<8x8x128xbf16, #tpu.memory_space<vmem>>, vector<8x1x128xbf16>
    %129 = vector.shape_cast %128 : vector<8x1x128xbf16> to vector<8x128xbf16>
    %c32 = arith.constant 32 : index
    %c0_70 = arith.constant 0 : index
    %130 = vector.load %arg6[%c32, %c0_70] : memref<64x128xbf16, #tpu.memory_space<vmem>>, vector<8x128xbf16>
    tpu.vector_store %arg6[%c32, %c0_70], %129 {strides = array<i32>} : memref<64x128xbf16, #tpu.memory_space<vmem>>, vector<8x128xbf16>,
    %c0_71 = arith.constant 0 : index
    %c5 = arith.constant 5 : index
    %c0_72 = arith.constant 0 : index
    %131 = vector.load %arg9[%c0_71, %c5, %c0_72] : memref<8x8x128xbf16, #tpu.memory_space<vmem>>, vector<8x1x128xbf16>
    %132 = vector.shape_cast %131 : vector<8x1x128xbf16> to vector<8x128xbf16>
    %c40 = arith.constant 40 : index
    %c0_73 = arith.constant 0 : index
    %133 = vector.load %arg6[%c40, %c0_73] : memref<64x128xbf16, #tpu.memory_space<vmem>>, vector<8x128xbf16>
    tpu.vector_store %arg6[%c40, %c0_73], %132 {strides = array<i32>} : memref<64x128xbf16, #tpu.memory_space<vmem>>, vector<8x128xbf16>,
    %c0_74 = arith.constant 0 : index
    %c6 = arith.constant 6 : index
    %c0_75 = arith.constant 0 : index
    %134 = vector.load %arg9[%c0_74, %c6, %c0_75] : memref<8x8x128xbf16, #tpu.memory_space<vmem>>, vector<8x1x128xbf16>
    %135 = vector.shape_cast %134 : vector<8x1x128xbf16> to vector<8x128xbf16>
    %c48 = arith.constant 48 : index
    %c0_76 = arith.constant 0 : index
    %136 = vector.load %arg6[%c48, %c0_76] : memref<64x128xbf16, #tpu.memory_space<vmem>>, vector<8x128xbf16>
    tpu.vector_store %arg6[%c48, %c0_76], %135 {strides = array<i32>} : memref<64x128xbf16, #tpu.memory_space<vmem>>, vector<8x128xbf16>,
    %c0_77 = arith.constant 0 : index
    %c7 = arith.constant 7 : index
    %c0_78 = arith.constant 0 : index
    %137 = vector.load %arg9[%c0_77, %c7, %c0_78] : memref<8x8x128xbf16, #tpu.memory_space<vmem>>, vector<8x1x128xbf16>
    %138 = vector.shape_cast %137 : vector<8x1x128xbf16> to vector<8x128xbf16>
    %c56 = arith.constant 56 : index
    %c0_79 = arith.constant 0 : index
    %139 = vector.load %arg6[%c56, %c0_79] : memref<64x128xbf16, #tpu.memory_space<vmem>>, vector<8x128xbf16>
    tpu.vector_store %arg6[%c56, %c0_79], %138 {strides = array<i32>} : memref<64x128xbf16, #tpu.memory_space<vmem>>, vector<8x128xbf16>,
    return
  }
  func.func @transform_0(%arg0: i32) -> (i32, i32, i32) {
    %c0_i32 = arith.constant 0 : i32
    %c0_i32_0 = arith.constant 0 : i32
    %c0_i32_1 = arith.constant 0 : i32
    return %c0_i32, %arg0, %c0_i32_0 : i32, i32, i32
  }
  func.func @transform_1(%arg0: i32) -> (i32, i32) {
    %c0_i32 = arith.constant 0 : i32
    %c0_i32_0 = arith.constant 0 : i32
    return %arg0, %c0_i32 : i32, i32
  }
  func.func @transform_2(%arg0: i32) -> (i32, i32) {
    %c0_i32 = arith.constant 0 : i32
    %c0_i32_0 = arith.constant 0 : i32
    %c0_i32_1 = arith.constant 0 : i32
    return %c0_i32, %c0_i32_0 : i32, i32
  }
  func.func @transform_3(%arg0: i32) -> (i32, i32) {
    %c0_i32 = arith.constant 0 : i32
    %c0_i32_0 = arith.constant 0 : i32
    %c0_i32_1 = arith.constant 0 : i32
    return %c0_i32, %c0_i32_0 : i32, i32
  }
  func.func @transform_4(%arg0: i32) -> (i32, i32) {
    %c0_i32 = arith.constant 0 : i32
    %c0_i32_0 = arith.constant 0 : i32
    %c0_i32_1 = arith.constant 0 : i32
    return %c0_i32, %c0_i32_0 : i32, i32
  }
  func.func @transform_5(%arg0: i32) -> (i32, i32) {
    %c0_i32 = arith.constant 0 : i32
    %c0_i32_0 = arith.constant 0 : i32
    return %arg0, %c0_i32 : i32, i32
  }
  func.func @transform_6(%arg0: i32) -> (i32, i32) {
    %c0_i32 = arith.constant 0 : i32
    %c0_i32_0 = arith.constant 0 : i32
    return %arg0, %c0_i32 : i32, i32
  }
}

module attributes {stable_mosaic.version = 11 : i64} {
  func.func @projection_kernel(%arg0: i32, %arg1: i32, %arg2: memref<64x128xbf16, #tpu.memory_space<vmem>>, %arg3: memref<128x128xbf16, #tpu.memory_space<vmem>>, %arg4: memref<1x128xf32, #tpu.memory_space<vmem>>, %arg5: memref<64x128xf32, #tpu.memory_space<vmem>>) attributes {dimension_semantics = [#tpu.dimension_semantics<parallel>, #tpu.dimension_semantics<parallel>], iteration_bounds = array<i64: 1, 1>, scalar_prefetch = 0 : i64, scratch_operands = 0 : i64, tpu.core_type = #tpu.core_type<tc>, window_params = [{transform_indices = @transform_0, window_bounds = array<i64: 64, 128>}, {transform_indices = @transform_1, window_bounds = array<i64: 128, 128>}, {transform_indices = @transform_2, window_bounds = array<i64: 1, 128>}, {transform_indices = @transform_3, window_bounds = array<i64: 64, 128>}]} {
    %c0 = arith.constant 0 : index
    %c0_0 = arith.constant 0 : index
    %0 = vector.load %arg2[%c0, %c0_0] : memref<64x128xbf16, #tpu.memory_space<vmem>>, vector<64x128xbf16>
    %c0_1 = arith.constant 0 : index
    %c0_2 = arith.constant 0 : index
    %1 = vector.load %arg3[%c0_1, %c0_2] : memref<128x128xbf16, #tpu.memory_space<vmem>>, vector<128x128xbf16>
    %cst = arith.constant dense<0.000000e+00> : vector<64x128xf32>
    %2 = tpu.matmul %0, %1, %cst {dimension_numbers = #tpu.dot_dimension_numbers<[1], [0], [0], [1], [0, 0, 1, 1], [], []>} : vector<64x128xbf16>, vector<128x128xbf16>, vector<64x128xf32> -> vector<64x128xf32>
    %c0_3 = arith.constant 0 : index
    %c0_4 = arith.constant 0 : index
    %3 = vector.load %arg4[%c0_3, %c0_4] : memref<1x128xf32, #tpu.memory_space<vmem>>, vector<1x128xf32>
    %4 = vector.broadcast %3 : vector<1x128xf32> to vector<64x128xf32>
    %5 = arith.addf %2, %4 : vector<64x128xf32>
    %c0_5 = arith.constant 0 : index
    %c0_6 = arith.constant 0 : index
    %6 = vector.load %arg5[%c0_5, %c0_6] : memref<64x128xf32, #tpu.memory_space<vmem>>, vector<64x128xf32>
    tpu.vector_store %arg5[%c0_5, %c0_6], %5 {strides = array<i32>} : memref<64x128xf32, #tpu.memory_space<vmem>>, vector<64x128xf32>,
    return
  }
  func.func @transform_0(%arg0: i32, %arg1: i32) -> (i32, i32) {
    %c0_i32 = arith.constant 0 : i32
    %c0_i32_0 = arith.constant 0 : i32
    return %arg1, %c0_i32 : i32, i32
  }
  func.func @transform_1(%arg0: i32, %arg1: i32) -> (i32, i32) {
    %c0_i32 = arith.constant 0 : i32
    %c0_i32_0 = arith.constant 0 : i32
    return %c0_i32, %arg0 : i32, i32
  }
  func.func @transform_2(%arg0: i32, %arg1: i32) -> (i32, i32) {
    %c0_i32 = arith.constant 0 : i32
    %c0_i32_0 = arith.constant 0 : i32
    return %c0_i32, %arg0 : i32, i32
  }
  func.func @transform_3(%arg0: i32, %arg1: i32) -> (i32, i32) {
    %c0_i32 = arith.constant 0 : i32
    return %arg1, %arg0 : i32, i32
  }
}

</mosaic_0001>

<llo_original>
// kernel: rnnlm_forward.3
$region0: #{rnnlm_forward.3}
  #allocation0 [shape = 'u32[]', space=smem, size = 0x4, offset = 0x4, fixed_abs, tag = 'smem constant byte address 0x4 - core index']
  #allocation1 [shape = 'u32[144,128]{1,0:T(1,128)}', space=vmem, size = 0x12000, scoped, tag = 'internal scratch']
  %s0 = inlined_call_operand.vmem [shape: bf16[64,128], index: 0, kind: input, shape index: {}]
  %s1 = inlined_call_operand.vmem [shape: bf16[128,128], index: 1, kind: input, shape index: {}]
  %s2 = inlined_call_operand.vmem [shape: f32[1,128], index: 2, kind: input, shape index: {}]
  %s3 = inlined_call_operand.vmem [shape: f32[64,128], index: 3, kind: output, shape index: {}]
  %s4 = sld [smem:[#allocation0]]
  $region22: #{rnnlm_forward.3} parent=0
    _
  %s6 = ssub.s32 1, %s4
  %s7 = scalar_select 0, %s6, %s4
  // Predicated region
  $region2: #{rnnlm_forward.3} parent=0 // pred_check
    _
  $region3: #{rnnlm_forward.3} parent=0 // pred_check_branch
    %9 = sbr.rel (0) target = $region5
  $region4: #{rnnlm_forward.3} parent=0 // pred_region
    _
  $region5: #{rnnlm_forward.3} parent=0 // pred_fallthru
    _
  // Predicated region
  $region6: #{rnnlm_forward.3} parent=0 // pred_check
    _
  $region7: #{rnnlm_forward.3} parent=0 // pred_check_branch
    %11 = sbr.rel (0) target = $region9
  $region8: #{rnnlm_forward.3} parent=0 // pred_region
    _
  $region9: #{rnnlm_forward.3} parent=0 // pred_fallthru
    _
  // Predicated region
  $region10: #{rnnlm_forward.3} parent=0 // pred_check
    _
  $region11: #{rnnlm_forward.3} parent=0 // pred_check_branch
    %13 = sbr.rel (0) target = $region13
  $region12: #{rnnlm_forward.3} parent=0 // pred_region
    _
  $region13: #{rnnlm_forward.3} parent=0 // pred_fallthru
    _
  %v15 = vld [vmem:[%s0] sm:$0xf]
  %v16 = vld [vmem:[%s0 + $0x4] sm:$0xf]
  %v17 = vld [vmem:[%s0 + $0x8] sm:$0xf]
  %v18 = vld [vmem:[%s0 + $0xc] sm:$0xf]
  %v19 = vld [vmem:[%s0 + $0x10] sm:$0xf]
  %v20 = vld [vmem:[%s0 + $0x14] sm:$0xf]
  %v21 = vld [vmem:[%s0 + $0x18] sm:$0xf]
  %v22 = vld [vmem:[%s0 + $0x1c] sm:$0xf]
  %v23 = vld [vmem:[%s1] sm:$0xf]
  %v24 = vld [vmem:[%s1 + $0x4] sm:$0xf]
  %v25 = vld [vmem:[%s1 + $0x8] sm:$0xf]
  %v26 = vld [vmem:[%s1 + $0xc] sm:$0xf]
  %v27 = vld [vmem:[%s1 + $0x10] sm:$0xf]
  %v28 = vld [vmem:[%s1 + $0x14] sm:$0xf]
  %v29 = vld [vmem:[%s1 + $0x18] sm:$0xf]
  %v30 = vld [vmem:[%s1 + $0x1c] sm:$0xf]
  %v31 = vld [vmem:[%s1 + $0x20] sm:$0xf]
  %v32 = vld [vmem:[%s1 + $0x24] sm:$0xf]
  %v33 = vld [vmem:[%s1 + $0x28] sm:$0xf]
  %v34 = vld [vmem:[%s1 + $0x2c] sm:$0xf]
  %v35 = vld [vmem:[%s1 + $0x30] sm:$0xf]
  %v36 = vld [vmem:[%s1 + $0x34] sm:$0xf]
  %v37 = vld [vmem:[%s1 + $0x38] sm:$0xf]
  %v38 = vld [vmem:[%s1 + $0x3c] sm:$0xf]
  %v39 = vld [vmem:[%s2] sm:$0x1]
  %v41 = vlaneseq
  %v42 = vshrl.u32 %v41, 7
  %v43 = vsub.s32 0, %v42
  %v44 = vrot.slane %v39, %v43
  %v54 = vunpack.c.l.b16 %v15
  %v55 = vunpack.c.l.b16 %v16
  %v56 = vunpack.c.l.b16 %v17
  %v57 = vunpack.c.l.b16 %v18
  %v58 = vunpack.c.l.b16 %v19
  %v59 = vunpack.c.l.b16 %v20
  %v60 = vunpack.c.l.b16 %v21
  %v61 = vunpack.c.l.b16 %v22
  %v62 = vpack.c.b16 %v55, %v54
  %v63 = vpack.c.b16 %v57, %v56
  %v64 = vpack.c.b16 %v59, %v58
  %v65 = vpack.c.b16 %v61, %v60
  %v86 = vunpack.c.l.b16 %v23
  %v87 = vunpack.c.l.b16 %v24
  %v88 = vunpack.c.l.b16 %v25
  %v89 = vunpack.c.l.b16 %v26
  %v90 = vunpack.c.l.b16 %v27
  %v91 = vunpack.c.l.b16 %v28
  %v92 = vunpack.c.l.b16 %v29
  %v93 = vunpack.c.l.b16 %v30
  %v94 = vunpack.c.l.b16 %v31
  %v95 = vunpack.c.l.b16 %v32
  %v96 = vunpack.c.l.b16 %v33
  %v97 = vunpack.c.l.b16 %v34
  %v98 = vunpack.c.l.b16 %v35
  %v99 = vunpack.c.l.b16 %v36
  %v100 = vunpack.c.l.b16 %v37
  %v101 = vunpack.c.l.b16 %v38
  %v102 = vpack.c.b16 %v87, %v86
  %v103 = vpack.c.b16 %v89, %v88
  %v104 = vpack.c.b16 %v91, %v90
  %v105 = vpack.c.b16 %v93, %v92
  %v106 = vpack.c.b16 %v95, %v94
  %v107 = vpack.c.b16 %v97, %v96
  %v108 = vpack.c.b16 %v99, %v98
  %v109 = vpack.c.b16 %v101, %v100
  %118 = vmatprep.subr.bf16.mxu0 0
  %119 = vmatpush1.bf16.msra.mxu0 %v102
  %120 = vmatprep.subr.bf16.mxu0 0
  %121 = vmatpush1.bf16.msra.mxu0 %v103
  %122 = vmatprep.subr.bf16.mxu0 0
  %123 = vmatpush1.bf16.msra.mxu0 %v104
  %124 = vmatprep.subr.bf16.mxu0 0
  %125 = vmatpush1.bf16.msra.mxu0 %v105
  %126 = vmatprep.subr.bf16.mxu0 0
  %127 = vmatpush1.bf16.msra.mxu0 %v106
  %128 = vmatprep.subr.bf16.mxu0 0
  %129 = vmatpush1.bf16.msra.mxu0 %v107
  %130 = vmatprep.subr.bf16.mxu0 0
  %131 = vmatpush1.bf16.msra.mxu0 %v108
  %132 = vmatprep.subr.bf16.mxu0 0
  %133 = vmatpush1.bf16.msra.mxu0 %v109
  %134 = vmatprep.subr.bf16.mxu0 0
  %135 = vmatpush1.bf16.msra.mxu0 0
  %136 = vmatprep.subr.bf16.mxu0 0
  %137 = vmatpush1.bf16.msra.mxu0 0
  %138 = vmatprep.subr.bf16.mxu0 0
  %139 = vmatpush1.bf16.msra.mxu0 0
  %140 = vmatprep.subr.bf16.mxu0 0
  %141 = vmatpush1.bf16.msra.mxu0 0
  %142 = vmatprep.subr.bf16.mxu0 0
  %143 = vmatpush1.bf16.msra.mxu0 0
  %144 = vmatprep.subr.bf16.mxu0 0
  %145 = vmatpush1.bf16.msra.mxu0 0
  %146 = vmatprep.subr.bf16.mxu0 0
  %147 = vmatpush1.bf16.msra.mxu0 0
  %148 = vmatprep.subr.bf16.mxu0 0
  %149 = vmatpush1.bf16.msra.mxu0 0
  %150 = vmatprep.mubr.bf16.mxu0 0
  %151 = vmatmul.mubr.bf16.gmra.mrb[0].mxu0 %v62
  %v152 = vpop.f32.mrb[0].mxu0
  %v153 = vadd.f32 %v44, %v152
  %v154 = vpop.f32.mrb[0].mxu0
  %v155 = vpop.f32.mrb[0].mxu0
  %v156 = vadd.f32 %v44, %v155
  %v157 = vpop.f32.mrb[0].mxu0
  %158 = vmatprep.mubr.bf16.mxu0 0
  %159 = vmatmul.mubr.bf16.gmra.mrb[0].mxu0 %v63
  %v160 = vpop.f32.mrb[0].mxu0
  %v161 = vadd.f32 %v44, %v160
  %v162 = vpop.f32.mrb[0].mxu0
  %v163 = vpop.f32.mrb[0].mxu0
  %v164 = vadd.f32 %v44, %v163
  %v165 = vpop.f32.mrb[0].mxu0
  %166 = vmatprep.mubr.bf16.mxu0 0
  %167 = vmatmul.mubr.bf16.gmra.mrb[0].mxu0 %v64
  %v168 = vpop.f32.mrb[0].mxu0
  %v169 = vadd.f32 %v44, %v168
  %v170 = vpop.f32.mrb[0].mxu0
  %v171 = vpop.f32.mrb[0].mxu0
  %v172 = vadd.f32 %v44, %v171
  %v173 = vpop.f32.mrb[0].mxu0
  %174 = vmatprep.mubr.bf16.mxu0 0
  %175 = vmatmul.mubr.bf16.gmra.mrb[0].mxu0 %v65
  %v176 = vpop.f32.mrb[0].mxu0
  %v177 = vadd.f32 %v44, %v176
  %v178 = vpop.f32.mrb[0].mxu0
  %v179 = vpop.f32.mrb[0].mxu0
  %v180 = vadd.f32 %v44, %v179
  %v181 = vpop.f32.mrb[0].mxu0
  %182 = vdwg.mxu0
  %183 = vst [vmem:[%s3] sm:$0xff] %v153
  %184 = vst [vmem:[%s3 + $0x8] sm:$0xff] %v156
  %185 = vst [vmem:[%s3 + $0x10] sm:$0xff] %v161
  %186 = vst [vmem:[%s3 + $0x18] sm:$0xff] %v164
  %187 = vst [vmem:[%s3 + $0x20] sm:$0xff] %v169
  %188 = vst [vmem:[%s3 + $0x28] sm:$0xff] %v172
  %189 = vst [vmem:[%s3 + $0x30] sm:$0xff] %v177
  %190 = vst [vmem:[%s3 + $0x38] sm:$0xff] %v180
  // Predicated region
  $region14: #{rnnlm_forward.3} parent=0 // pred_check
    _
  $region15: #{rnnlm_forward.3} parent=0 // pred_check_branch
    %192 = sbr.rel (0) target = $region17
  $region16: #{rnnlm_forward.3} parent=0 // pred_region
    _
  $region17: #{rnnlm_forward.3} parent=0 // pred_fallthru
    _
  // Predicated region
  $region18: #{rnnlm_forward.3} parent=0 // pred_check
    _
  $region19: #{rnnlm_forward.3} parent=0 // pred_check_branch
    %194 = sbr.rel (0) target = $region21
  $region20: #{rnnlm_forward.3} parent=0 // pred_region
    _
  $region21: #{rnnlm_forward.3} parent=0 // pred_fallthru
    _

// kernel: rnnlm_forward.2
$region0: #{rnnlm_forward.2}
  #allocation0 [shape = 'u32[]', space=smem, size = 0x4, offset = 0x4, fixed_abs, tag = 'smem constant byte address 0x4 - core index']
  #allocation1 [shape = 'u32[144,128]{1,0:T(1,128)}', space=vmem, size = 0x12000, scoped, tag = 'internal scratch']
  #allocation2 [shape = 'f32[64,128]{1,0:T(8,128)}', space=vmem, size = 0x8000, scoped, tag = 'scratch operand']
  #allocation3 [shape = 'bf16[8,8,128]{2,1,0:T(8,128)(2,1)}', space=vmem, size = 0x4000, scoped, tag = 'scratch operand']
  %s0 = inlined_call_operand.vmem [shape: f32[8,8,8], index: 0, kind: input, shape index: {}]
  %s1 = inlined_call_operand.vmem [shape: f32[8,128], index: 1, kind: input, shape index: {}]
  %s2 = inlined_call_operand.vmem [shape: bf16[8,128], index: 2, kind: input, shape index: {}]
  %s3 = inlined_call_operand.vmem [shape: bf16[128,128], index: 3, kind: input, shape index: {}]
  %s4 = inlined_call_operand.vmem [shape: f32[1,128], index: 4, kind: input, shape index: {}]
  %s5 = inlined_call_operand.vmem [shape: bf16[64,128], index: 5, kind: output, shape index: {0}]
  %s6 = inlined_call_operand.vmem [shape: f32[8,128], index: 6, kind: output, shape index: {1}]
  %7 = xla_tuple %s5, %s6
  %s8 = sld [smem:[#allocation0]]
  $region38: #{rnnlm_forward.2} parent=0
    _
  %s10 = ssub.s32 1, %s8
  %s11 = scalar_select 0, %s10, %s8
  // Predicated region
  $region2: #{rnnlm_forward.2} parent=0 // pred_check
    _
  $region3: #{rnnlm_forward.2} parent=0 // pred_check_branch
    %13 = sbr.rel (0) target = $region5
  $region4: #{rnnlm_forward.2} parent=0 // pred_region
    _
  $region5: #{rnnlm_forward.2} parent=0 // pred_fallthru
    _
  // Predicated region
  $region6: #{rnnlm_forward.2} parent=0 // pred_check
    _
  $region7: #{rnnlm_forward.2} parent=0 // pred_check_branch
    %15 = sbr.rel (0) target = $region9
  $region8: #{rnnlm_forward.2} parent=0 // pred_region
    _
  $region9: #{rnnlm_forward.2} parent=0 // pred_fallthru
    _
  // Predicated region
  $region10: #{rnnlm_forward.2} parent=0 // pred_check
    _
  $region11: #{rnnlm_forward.2} parent=0 // pred_check_branch
    %17 = sbr.rel (0) target = $region13
  $region12: #{rnnlm_forward.2} parent=0 // pred_region
    _
  $region13: #{rnnlm_forward.2} parent=0 // pred_fallthru
    _
  // Predicated region
  $region14: #{rnnlm_forward.2} parent=0 // pred_check
    _
  $region15: #{rnnlm_forward.2} parent=0 // pred_check_branch
    %19 = sbr.rel (0) target = $region17
  $region16: #{rnnlm_forward.2} parent=0 // pred_region
    _
  $region17: #{rnnlm_forward.2} parent=0 // pred_fallthru
    _
  // Predicated region
  $region18: #{rnnlm_forward.2} parent=0 // pred_check
    _
  $region19: #{rnnlm_forward.2} parent=0 // pred_check_branch
    %21 = sbr.rel (0) target = $region21
  $region20: #{rnnlm_forward.2} parent=0 // pred_region
    _
  $region21: #{rnnlm_forward.2} parent=0 // pred_fallthru
    _
  %v23 = vld [vmem:[%s0] sm:$0xff]
  %v24 = vld [vmem:[%s0 + $0x8] sm:$0xff]
  %v25 = vld [vmem:[%s0 + $0x10] sm:$0xff]
  %v26 = vld [vmem:[%s0 + $0x18] sm:$0xff]
  %v27 = vld [vmem:[%s0 + $0x20] sm:$0xff]
  %v28 = vld [vmem:[%s0 + $0x28] sm:$0xff]
  %v29 = vld [vmem:[%s0 + $0x30] sm:$0xff]
  %v30 = vld [vmem:[%s0 + $0x38] sm:$0xff]
  %v31 = vpack.c.bf16 %v24, %v23
  %v32 = vpack.c.bf16 %v26, %v25
  %v33 = vpack.c.bf16 %v28, %v27
  %v34 = vpack.c.bf16 %v30, %v29
  %v35 = vld [vmem:[%s2] sm:$0xf]
  %v36 = vld [vmem:[%s4] sm:$0x1]
  %v38 = vlaneseq
  %v39 = vshrl.u32 %v38, 7
  %v40 = vsub.s32 0, %v39
  %v41 = vrot.slane %v36, %v40
  %vm43 = vcmask 64512
  %v45 = vsel %vm43, %v31, 0
  %v48 = vsel %vm43, %v32, 0
  %v51 = vsel %vm43, %v33, 0
  %v54 = vsel %vm43, %v34, 0
  %vm56 = vcmask 1043456
  %v58 = vsel %vm56, %v35, 0
  %60 = vmatprep.subr.bf16.mxu0 0
  %61 = vmatpush1.bf16.msra.mxu0 %v58
  %62 = vmatprep.subr.bf16.mxu0 0
  %63 = vmatpush1.bf16.msra.mxu0 0
  %64 = vmatprep.subr.bf16.mxu0 0
  %65 = vmatpush1.bf16.msra.mxu0 0
  %66 = vmatprep.subr.bf16.mxu0 0
  %67 = vmatpush1.bf16.msra.mxu0 0
  %68 = vmatprep.subr.bf16.mxu0 0
  %69 = vmatpush1.bf16.msra.mxu0 0
  %70 = vmatprep.subr.bf16.mxu0 0
  %71 = vmatpush1.bf16.msra.mxu0 0
  %72 = vmatprep.subr.bf16.mxu0 0
  %73 = vmatpush1.bf16.msra.mxu0 0
  %74 = vmatprep.subr.bf16.mxu0 0
  %75 = vmatpush1.bf16.msra.mxu0 0
  %76 = vmatprep.subr.bf16.mxu0 0
  %77 = vmatpush1.bf16.msra.mxu0 0
  %78 = vmatprep.subr.bf16.mxu0 0
  %79 = vmatpush1.bf16.msra.mxu0 0
  %80 = vmatprep.subr.bf16.mxu0 0
  %81 = vmatpush1.bf16.msra.mxu0 0
  %82 = vmatprep.subr.bf16.mxu0 0
  %83 = vmatpush1.bf16.msra.mxu0 0
  %84 = vmatprep.subr.bf16.mxu0 0
  %85 = vmatpush1.bf16.msra.mxu0 0
  %86 = vmatprep.subr.bf16.mxu0 0
  %87 = vmatpush1.bf16.msra.mxu0 0
  %88 = vmatprep.subr.bf16.mxu0 0
  %89 = vmatpush1.bf16.msra.mxu0 0
  %90 = vmatprep.subr.bf16.mxu0 0
  %91 = vmatpush1.bf16.msra.mxu0 0
  %92 = vmatprep.mubr.bf16.mxu0 0
  %93 = vmatmul.mubr.bf16.gmra.mrb[0].mxu0 %v45
  %v94 = vpop.f32.mrb[0].mxu0
  %v95 = vadd.f32 %v41, %v94
  %v96 = vpop.f32.mrb[0].mxu0
  %v97 = vpop.f32.mrb[0].mxu0
  %v98 = vadd.f32 %v41, %v97
  %v99 = vpop.f32.mrb[0].mxu0
  %100 = vmatprep.mubr.bf16.mxu0 0
  %101 = vmatmul.mubr.bf16.gmra.mrb[0].mxu0 %v48
  %v102 = vpop.f32.mrb[0].mxu0
  %v103 = vadd.f32 %v41, %v102
  %v104 = vpop.f32.mrb[0].mxu0
  %v105 = vpop.f32.mrb[0].mxu0
  %v106 = vadd.f32 %v41, %v105
  %v107 = vpop.f32.mrb[0].mxu0
  %108 = vmatprep.mubr.bf16.mxu0 0
  %109 = vmatmul.mubr.bf16.gmra.mrb[0].mxu0 %v51
  %v110 = vpop.f32.mrb[0].mxu0
  %v111 = vadd.f32 %v41, %v110
  %v112 = vpop.f32.mrb[0].mxu0
  %v113 = vpop.f32.mrb[0].mxu0
  %v114 = vadd.f32 %v41, %v113
  %v115 = vpop.f32.mrb[0].mxu0
  %116 = vmatprep.mubr.bf16.mxu0 0
  %117 = vmatmul.mubr.bf16.gmra.mrb[0].mxu0 %v54
  %v118 = vpop.f32.mrb[0].mxu0
  %v119 = vadd.f32 %v41, %v118
  %v120 = vpop.f32.mrb[0].mxu0
  %v121 = vpop.f32.mrb[0].mxu0
  %v122 = vadd.f32 %v41, %v121
  %v123 = vpop.f32.mrb[0].mxu0
  %124 = vdwg.mxu0
  %125 = vst [vmem:[#allocation2] sm:$0xff] %v95
  %126 = vst [vmem:[#allocation2 + $0x8] sm:$0xff] %v98
  %127 = vst [vmem:[#allocation2 + $0x10] sm:$0xff] %v103
  %128 = vst [vmem:[#allocation2 + $0x18] sm:$0xff] %v106
  %129 = vst [vmem:[#allocation2 + $0x20] sm:$0xff] %v111
  %130 = vst [vmem:[#allocation2 + $0x28] sm:$0xff] %v114
  %131 = vst [vmem:[#allocation2 + $0x30] sm:$0xff] %v119
  %132 = vst [vmem:[#allocation2 + $0x38] sm:$0xff] %v122
  %v133 = vld [vmem:[%s3] sm:$0xf]
  %v134 = vld [vmem:[%s3 + $0x4] sm:$0xf]
  %v135 = vld [vmem:[%s3 + $0x8] sm:$0xf]
  %v136 = vld [vmem:[%s3 + $0xc] sm:$0xf]
  %v137 = vld [vmem:[%s3 + $0x10] sm:$0xf]
  %v138 = vld [vmem:[%s3 + $0x14] sm:$0xf]
  %v139 = vld [vmem:[%s3 + $0x18] sm:$0xf]
  %v140 = vld [vmem:[%s3 + $0x1c] sm:$0xf]
  %v141 = vld [vmem:[%s3 + $0x20] sm:$0xf]
  %v142 = vld [vmem:[%s3 + $0x24] sm:$0xf]
  %v143 = vld [vmem:[%s3 + $0x28] sm:$0xf]
  %v144 = vld [vmem:[%s3 + $0x2c] sm:$0xf]
  %v145 = vld [vmem:[%s3 + $0x30] sm:$0xf]
  %v146 = vld [vmem:[%s3 + $0x34] sm:$0xf]
  %v147 = vld [vmem:[%s3 + $0x38] sm:$0xf]
  %v148 = vld [vmem:[%s3 + $0x3c] sm:$0xf]
  %v149 = vld [vmem:[%s1] sm:$0xff]
  %v150 = vld [vmem:[#allocation2] sm:$0xff]
  %v151 = vpack.c.bf16 %v149, %v149
  %v168 = vunpack.c.l.b16 %v133
  %v169 = vunpack.c.l.b16 %v134
  %v170 = vunpack.c.l.b16 %v135
  %v171 = vunpack.c.l.b16 %v136
  %v172 = vunpack.c.l.b16 %v137
  %v173 = vunpack.c.l.b16 %v138
  %v174 = vunpack.c.l.b16 %v139
  %v175 = vunpack.c.l.b16 %v140
  %v176 = vunpack.c.l.b16 %v141
  %v177 = vunpack.c.l.b16 %v142
  %v178 = vunpack.c.l.b16 %v143
  %v179 = vunpack.c.l.b16 %v144
  %v180 = vunpack.c.l.b16 %v145
  %v181 = vunpack.c.l.b16 %v146
  %v182 = vunpack.c.l.b16 %v147
  %v183 = vunpack.c.l.b16 %v148
  %v184 = vpack.c.b16 %v169, %v168
  %v185 = vpack.c.b16 %v171, %v170
  %v186 = vpack.c.b16 %v173, %v172
  %v187 = vpack.c.b16 %v175, %v174
  %v188 = vpack.c.b16 %v177, %v176
  %v189 = vpack.c.b16 %v179, %v178
  %v190 = vpack.c.b16 %v181, %v180
  %v191 = vpack.c.b16 %v183, %v182
  %200 = vmatprep.subr.bf16.mxu0 0
  %201 = vmatpush1.bf16.msra.mxu0 %v184
  %202 = vmatprep.subr.bf16.mxu0 0
  %203 = vmatpush1.bf16.msra.mxu0 %v185
  %204 = vmatprep.subr.bf16.mxu0 0
  %205 = vmatpush1.bf16.msra.mxu0 %v186
  %206 = vmatprep.subr.bf16.mxu0 0
  %207 = vmatpush1.bf16.msra.mxu0 %v187
  %208 = vmatprep.subr.bf16.mxu0 0
  %209 = vmatpush1.bf16.msra.mxu0 %v188
  %210 = vmatprep.subr.bf16.mxu0 0
  %211 = vmatpush1.bf16.msra.mxu0 %v189
  %212 = vmatprep.subr.bf16.mxu0 0
  %213 = vmatpush1.bf16.msra.mxu0 %v190
  %214 = vmatprep.subr.bf16.mxu0 0
  %215 = vmatpush1.bf16.msra.mxu0 %v191
  %216 = vmatprep.subr.bf16.mxu0 0
  %217 = vmatpush1.bf16.msra.mxu0 0
  %218 = vmatprep.subr.bf16.mxu0 0
  %219 = vmatpush1.bf16.msra.mxu0 0
  %220 = vmatprep.subr.bf16.mxu0 0
  %221 = vmatpush1.bf16.msra.mxu0 0
  %222 = vmatprep.subr.bf16.mxu0 0
  %223 = vmatpush1.bf16.msra.mxu0 0
  %224 = vmatprep.subr.bf16.mxu0 0
  %225 = vmatpush1.bf16.msra.mxu0 0
  %226 = vmatprep.subr.bf16.mxu0 0
  %227 = vmatpush1.bf16.msra.mxu0 0
  %228 = vmatprep.subr.bf16.mxu0 0
  %229 = vmatpush1.bf16.msra.mxu0 0
  %230 = vmatprep.subr.bf16.mxu0 0
  %231 = vmatpush1.bf16.msra.mxu0 0
  %232 = vmatprep.mubr.bf16.mxu0 0
  %233 = vmatmul.mubr.bf16.gmra.mrb[0].mxu0 %v151
  %v234 = vpop.f32.mrb[0].mxu0
  %v235 = vadd.f32 0.0, %v234
  %v236 = vpop.f32.mrb[0].mxu0
  %v237 = vpop.f32.mrb[0].mxu0
  %v238 = vpop.f32.mrb[0].mxu0
  %239 = vdwg.mxu0
  %v240 = vadd.f32 %v150, %v235
  %v241 = vtanh.pop %v240
  %v242 = vpack.c.bf16 %v241, %v241
  %243 = vst [vmem:[#allocation3] sm:$0xf] %v242
  %s244 = scalar_lea.vmem [#allocation2], 8
  %v245 = vld [vmem:[%s244] sm:$0xff]
  %246 = vmatprep.subr.bf16.mxu0 0
  %247 = vmatpush1.bf16.msra.mxu0 %v184
  %248 = vmatprep.subr.bf16.mxu0 0
  %249 = vmatpush1.bf16.msra.mxu0 %v185
  %250 = vmatprep.subr.bf16.mxu0 0
  %251 = vmatpush1.bf16.msra.mxu0 %v186
  %252 = vmatprep.subr.bf16.mxu0 0
  %253 = vmatpush1.bf16.msra.mxu0 %v187
  %254 = vmatprep.subr.bf16.mxu0 0
  %255 = vmatpush1.bf16.msra.mxu0 %v188
  %256 = vmatprep.subr.bf16.mxu0 0
  %257 = vmatpush1.bf16.msra.mxu0 %v189
  %258 = vmatprep.subr.bf16.mxu0 0
  %259 = vmatpush1.bf16.msra.mxu0 %v190
  %260 = vmatprep.subr.bf16.mxu0 0
  %261 = vmatpush1.bf16.msra.mxu0 %v191
  %262 = vmatprep.subr.bf16.mxu0 0
  %263 = vmatpush1.bf16.msra.mxu0 0
  %264 = vmatprep.subr.bf16.mxu0 0
  %265 = vmatpush1.bf16.msra.mxu0 0
  %266 = vmatprep.subr.bf16.mxu0 0
  %267 = vmatpush1.bf16.msra.mxu0 0
  %268 = vmatprep.subr.bf16.mxu0 0
  %269 = vmatpush1.bf16.msra.mxu0 0
  %270 = vmatprep.subr.bf16.mxu0 0
  %271 = vmatpush1.bf16.msra.mxu0 0
  %272 = vmatprep.subr.bf16.mxu0 0
  %273 = vmatpush1.bf16.msra.mxu0 0
  %274 = vmatprep.subr.bf16.mxu0 0
  %275 = vmatpush1.bf16.msra.mxu0 0
  %276 = vmatprep.subr.bf16.mxu0 0
  %277 = vmatpush1.bf16.msra.mxu0 0
  %278 = vmatprep.mubr.bf16.mxu0 0
  %279 = vmatmul.mubr.bf16.gmra.mrb[0].mxu0 %v242
  %v280 = vpop.f32.mrb[0].mxu0
  %v281 = vadd.f32 0.0, %v280
  %v282 = vpop.f32.mrb[0].mxu0
  %v283 = vpop.f32.mrb[0].mxu0
  %v284 = vpop.f32.mrb[0].mxu0
  %285 = vdwg.mxu0
  %v286 = vadd.f32 %v245, %v281
  %v287 = vtanh.pop %v286
  %v288 = vpack.c.bf16 %v287, %v287
  %s289 = scalar_lea.vmem [#allocation3], 4
  %290 = vst [vmem:[%s289] sm:$0xf] %v288
  %s291 = scalar_lea.vmem [#allocation2], 16
  %v292 = vld [vmem:[%s291] sm:$0xff]
  %293 = vmatprep.subr.bf16.mxu0 0
  %294 = vmatpush1.bf16.msra.mxu0 %v184
  %295 = vmatprep.subr.bf16.mxu0 0
  %296 = vmatpush1.bf16.msra.mxu0 %v185
  %297 = vmatprep.subr.bf16.mxu0 0
  %298 = vmatpush1.bf16.msra.mxu0 %v186
  %299 = vmatprep.subr.bf16.mxu0 0
  %300 = vmatpush1.bf16.msra.mxu0 %v187
  %301 = vmatprep.subr.bf16.mxu0 0
  %302 = vmatpush1.bf16.msra.mxu0 %v188
  %303 = vmatprep.subr.bf16.mxu0 0
  %304 = vmatpush1.bf16.msra.mxu0 %v189
  %305 = vmatprep.subr.bf16.mxu0 0
  %306 = vmatpush1.bf16.msra.mxu0 %v190
  %307 = vmatprep.subr.bf16.mxu0 0
  %308 = vmatpush1.bf16.msra.mxu0 %v191
  %309 = vmatprep.subr.bf16.mxu0 0
  %310 = vmatpush1.bf16.msra.mxu0 0
  %311 = vmatprep.subr.bf16.mxu0 0
  %312 = vmatpush1.bf16.msra.mxu0 0
  %313 = vmatprep.subr.bf16.mxu0 0
  %314 = vmatpush1.bf16.msra.mxu0 0
  %315 = vmatprep.subr.bf16.mxu0 0
  %316 = vmatpush1.bf16.msra.mxu0 0
  %317 = vmatprep.subr.bf16.mxu0 0
  %318 = vmatpush1.bf16.msra.mxu0 0
  %319 = vmatprep.subr.bf16.mxu0 0
  %320 = vmatpush1.bf16.msra.mxu0 0
  %321 = vmatprep.subr.bf16.mxu0 0
  %322 = vmatpush1.bf16.msra.mxu0 0
  %323 = vmatprep.subr.bf16.mxu0 0
  %324 = vmatpush1.bf16.msra.mxu0 0
  %325 = vmatprep.mubr.bf16.mxu0 0
  %326 = vmatmul.mubr.bf16.gmra.mrb[0].mxu0 %v288
  %v327 = vpop.f32.mrb[0].mxu0
  %v328 = vadd.f32 0.0, %v327
  %v329 = vpop.f32.mrb[0].mxu0
  %v330 = vpop.f32.mrb[0].mxu0
  %v331 = vpop.f32.mrb[0].mxu0
  %332 = vdwg.mxu0
  %v333 = vadd.f32 %v292, %v328
  %v334 = vtanh.pop %v333
  %v335 = vpack.c.bf16 %v334, %v334
  %s336 = scalar_lea.vmem [#allocation3], 8
  %337 = vst [vmem:[%s336] sm:$0xf] %v335
  %s338 = scalar_lea.vmem [#allocation2], 24
  %v339 = vld [vmem:[%s338] sm:$0xff]
  %340 = vmatprep.subr.bf16.mxu0 0
  %341 = vmatpush1.bf16.msra.mxu0 %v184
  %342 = vmatprep.subr.bf16.mxu0 0
  %343 = vmatpush1.bf16.msra.mxu0 %v185
  %344 = vmatprep.subr.bf16.mxu0 0
  %345 = vmatpush1.bf16.msra.mxu0 %v186
  %346 = vmatprep.subr.bf16.mxu0 0
  %347 = vmatpush1.bf16.msra.mxu0 %v187
  %348 = vmatprep.subr.bf16.mxu0 0
  %349 = vmatpush1.bf16.msra.mxu0 %v188
  %350 = vmatprep.subr.bf16.mxu0 0
  %351 = vmatpush1.bf16.msra.mxu0 %v189
  %352 = vmatprep.subr.bf16.mxu0 0
  %353 = vmatpush1.bf16.msra.mxu0 %v190
  %354 = vmatprep.subr.bf16.mxu0 0
  %355 = vmatpush1.bf16.msra.mxu0 %v191
  %356 = vmatprep.subr.bf16.mxu0 0
  %357 = vmatpush1.bf16.msra.mxu0 0
  %358 = vmatprep.subr.bf16.mxu0 0
  %359 = vmatpush1.bf16.msra.mxu0 0
  %360 = vmatprep.subr.bf16.mxu0 0
  %361 = vmatpush1.bf16.msra.mxu0 0
  %362 = vmatprep.subr.bf16.mxu0 0
  %363 = vmatpush1.bf16.msra.mxu0 0
  %364 = vmatprep.subr.bf16.mxu0 0
  %365 = vmatpush1.bf16.msra.mxu0 0
  %366 = vmatprep.subr.bf16.mxu0 0
  %367 = vmatpush1.bf16.msra.mxu0 0
  %368 = vmatprep.subr.bf16.mxu0 0
  %369 = vmatpush1.bf16.msra.mxu0 0
  %370 = vmatprep.subr.bf16.mxu0 0
  %371 = vmatpush1.bf16.msra.mxu0 0
  %372 = vmatprep.mubr.bf16.mxu0 0
  %373 = vmatmul.mubr.bf16.gmra.mrb[0].mxu0 %v335
  %v374 = vpop.f32.mrb[0].mxu0
  %v375 = vadd.f32 0.0, %v374
  %v376 = vpop.f32.mrb[0].mxu0
  %v377 = vpop.f32.mrb[0].mxu0
  %v378 = vpop.f32.mrb[0].mxu0
  %379 = vdwg.mxu0
  %v380 = vadd.f32 %v339, %v375
  %v381 = vtanh.pop %v380
  %v382 = vpack.c.bf16 %v381, %v381
  %s383 = scalar_lea.vmem [#allocation3], 12
  %384 = vst [vmem:[%s383] sm:$0xf] %v382
  %s385 = scalar_lea.vmem [#allocation2], 32
  %v386 = vld [vmem:[%s385] sm:$0xff]
  %387 = vmatprep.subr.bf16.mxu0 0
  %388 = vmatpush1.bf16.msra.mxu0 %v184
  %389 = vmatprep.subr.bf16.mxu0 0
  %390 = vmatpush1.bf16.msra.mxu0 %v185
  %391 = vmatprep.subr.bf16.mxu0 0
  %392 = vmatpush1.bf16.msra.mxu0 %v186
  %393 = vmatprep.subr.bf16.mxu0 0
  %394 = vmatpush1.bf16.msra.mxu0 %v187
  %395 = vmatprep.subr.bf16.mxu0 0
  %396 = vmatpush1.bf16.msra.mxu0 %v188
  %397 = vmatprep.subr.bf16.mxu0 0
  %398 = vmatpush1.bf16.msra.mxu0 %v189
  %399 = vmatprep.subr.bf16.mxu0 0
  %400 = vmatpush1.bf16.msra.mxu0 %v190
  %401 = vmatprep.subr.bf16.mxu0 0
  %402 = vmatpush1.bf16.msra.mxu0 %v191
  %403 = vmatprep.subr.bf16.mxu0 0
  %404 = vmatpush1.bf16.msra.mxu0 0
  %405 = vmatprep.subr.bf16.mxu0 0
  %406 = vmatpush1.bf16.msra.mxu0 0
  %407 = vmatprep.subr.bf16.mxu0 0
  %408 = vmatpush1.bf16.msra.mxu0 0
  %409 = vmatprep.subr.bf16.mxu0 0
  %410 = vmatpush1.bf16.msra.mxu0 0
  %411 = vmatprep.subr.bf16.mxu0 0
  %412 = vmatpush1.bf16.msra.mxu0 0
  %413 = vmatprep.subr.bf16.mxu0 0
  %414 = vmatpush1.bf16.msra.mxu0 0
  %415 = vmatprep.subr.bf16.mxu0 0
  %416 = vmatpush1.bf16.msra.mxu0 0
  %417 = vmatprep.subr.bf16.mxu0 0
  %418 = vmatpush1.bf16.msra.mxu0 0
  %419 = vmatprep.mubr.bf16.mxu0 0
  %420 = vmatmul.mubr.bf16.gmra.mrb[0].mxu0 %v382
  %v421 = vpop.f32.mrb[0].mxu0
  %v422 = vadd.f32 0.0, %v421
  %v423 = vpop.f32.mrb[0].mxu0
  %v424 = vpop.f32.mrb[0].mxu0
  %v425 = vpop.f32.mrb[0].mxu0
  %426 = vdwg.mxu0
  %v427 = vadd.f32 %v386, %v422
  %v428 = vtanh.pop %v427
  %v429 = vpack.c.bf16 %v428, %v428
  %s430 = scalar_lea.vmem [#allocation3], 16
  %431 = vst [vmem:[%s430] sm:$0xf] %v429
  %s432 = scalar_lea.vmem [#allocation2], 40
  %v433 = vld [vmem:[%s432] sm:$0xff]
  %434 = vmatprep.subr.bf16.mxu0 0
  %435 = vmatpush1.bf16.msra.mxu0 %v184
  %436 = vmatprep.subr.bf16.mxu0 0
  %437 = vmatpush1.bf16.msra.mxu0 %v185
  %438 = vmatprep.subr.bf16.mxu0 0
  %439 = vmatpush1.bf16.msra.mxu0 %v186
  %440 = vmatprep.subr.bf16.mxu0 0
  %441 = vmatpush1.bf16.msra.mxu0 %v187
  %442 = vmatprep.subr.bf16.mxu0 0
  %443 = vmatpush1.bf16.msra.mxu0 %v188
  %444 = vmatprep.subr.bf16.mxu0 0
  %445 = vmatpush1.bf16.msra.mxu0 %v189
  %446 = vmatprep.subr.bf16.mxu0 0
  %447 = vmatpush1.bf16.msra.mxu0 %v190
  %448 = vmatprep.subr.bf16.mxu0 0
  %449 = vmatpush1.bf16.msra.mxu0 %v191
  %450 = vmatprep.subr.bf16.mxu0 0
  %451 = vmatpush1.bf16.msra.mxu0 0
  %452 = vmatprep.subr.bf16.mxu0 0
  %453 = vmatpush1.bf16.msra.mxu0 0
  %454 = vmatprep.subr.bf16.mxu0 0
  %455 = vmatpush1.bf16.msra.mxu0 0
  %456 = vmatprep.subr.bf16.mxu0 0
  %457 = vmatpush1.bf16.msra.mxu0 0
  %458 = vmatprep.subr.bf16.mxu0 0
  %459 = vmatpush1.bf16.msra.mxu0 0
  %460 = vmatprep.subr.bf16.mxu0 0
  %461 = vmatpush1.bf16.msra.mxu0 0
  %462 = vmatprep.subr.bf16.mxu0 0
  %463 = vmatpush1.bf16.msra.mxu0 0
  %464 = vmatprep.subr.bf16.mxu0 0
  %465 = vmatpush1.bf16.msra.mxu0 0
  %466 = vmatprep.mubr.bf16.mxu0 0
  %467 = vmatmul.mubr.bf16.gmra.mrb[0].mxu0 %v429
  %v468 = vpop.f32.mrb[0].mxu0
  %v469 = vadd.f32 0.0, %v468
  %v470 = vpop.f32.mrb[0].mxu0
  %v471 = vpop.f32.mrb[0].mxu0
  %v472 = vpop.f32.mrb[0].mxu0
  %473 = vdwg.mxu0
  %v474 = vadd.f32 %v433, %v469
  %v475 = vtanh.pop %v474
  %v476 = vpack.c.bf16 %v475, %v475
  %s477 = scalar_lea.vmem [#allocation3], 20
  %478 = vst [vmem:[%s477] sm:$0xf] %v476
  %s479 = scalar_lea.vmem [#allocation2], 48
  %v480 = vld [vmem:[%s479] sm:$0xff]
  %481 = vmatprep.subr.bf16.mxu0 0
  %482 = vmatpush1.bf16.msra.mxu0 %v184
  %483 = vmatprep.subr.bf16.mxu0 0
  %484 = vmatpush1.bf16.msra.mxu0 %v185
  %485 = vmatprep.subr.bf16.mxu0 0
  %486 = vmatpush1.bf16.msra.mxu0 %v186
  %487 = vmatprep.subr.bf16.mxu0 0
  %488 = vmatpush1.bf16.msra.mxu0 %v187
  %489 = vmatprep.subr.bf16.mxu0 0
  %490 = vmatpush1.bf16.msra.mxu0 %v188
  %491 = vmatprep.subr.bf16.mxu0 0
  %492 = vmatpush1.bf16.msra.mxu0 %v189
  %493 = vmatprep.subr.bf16.mxu0 0
  %494 = vmatpush1.bf16.msra.mxu0 %v190
  %495 = vmatprep.subr.bf16.mxu0 0
  %496 = vmatpush1.bf16.msra.mxu0 %v191
  %497 = vmatprep.subr.bf16.mxu0 0
  %498 = vmatpush1.bf16.msra.mxu0 0
  %499 = vmatprep.subr.bf16.mxu0 0
  %500 = vmatpush1.bf16.msra.mxu0 0
  %501 = vmatprep.subr.bf16.mxu0 0
  %502 = vmatpush1.bf16.msra.mxu0 0
  %503 = vmatprep.subr.bf16.mxu0 0
  %504 = vmatpush1.bf16.msra.mxu0 0
  %505 = vmatprep.subr.bf16.mxu0 0
  %506 = vmatpush1.bf16.msra.mxu0 0
  %507 = vmatprep.subr.bf16.mxu0 0
  %508 = vmatpush1.bf16.msra.mxu0 0
  %509 = vmatprep.subr.bf16.mxu0 0
  %510 = vmatpush1.bf16.msra.mxu0 0
  %511 = vmatprep.subr.bf16.mxu0 0
  %512 = vmatpush1.bf16.msra.mxu0 0
  %513 = vmatprep.mubr.bf16.mxu0 0
  %514 = vmatmul.mubr.bf16.gmra.mrb[0].mxu0 %v476
  %v515 = vpop.f32.mrb[0].mxu0
  %v516 = vadd.f32 0.0, %v515
  %v517 = vpop.f32.mrb[0].mxu0
  %v518 = vpop.f32.mrb[0].mxu0
  %v519 = vpop.f32.mrb[0].mxu0
  %520 = vdwg.mxu0
  %v521 = vadd.f32 %v480, %v516
  %v522 = vtanh.pop %v521
  %v523 = vpack.c.bf16 %v522, %v522
  %s524 = scalar_lea.vmem [#allocation3], 24
  %525 = vst [vmem:[%s524] sm:$0xf] %v523
  %s526 = scalar_lea.vmem [#allocation2], 56
  %v527 = vld [vmem:[%s526] sm:$0xff]
  %528 = vmatprep.subr.bf16.mxu0 0
  %529 = vmatpush1.bf16.msra.mxu0 %v184
  %530 = vmatprep.subr.bf16.mxu0 0
  %531 = vmatpush1.bf16.msra.mxu0 %v185
  %532 = vmatprep.subr.bf16.mxu0 0
  %533 = vmatpush1.bf16.msra.mxu0 %v186
  %534 = vmatprep.subr.bf16.mxu0 0
  %535 = vmatpush1.bf16.msra.mxu0 %v187
  %536 = vmatprep.subr.bf16.mxu0 0
  %537 = vmatpush1.bf16.msra.mxu0 %v188
  %538 = vmatprep.subr.bf16.mxu0 0
  %539 = vmatpush1.bf16.msra.mxu0 %v189
  %540 = vmatprep.subr.bf16.mxu0 0
  %541 = vmatpush1.bf16.msra.mxu0 %v190
  %542 = vmatprep.subr.bf16.mxu0 0
  %543 = vmatpush1.bf16.msra.mxu0 %v191
  %544 = vmatprep.subr.bf16.mxu0 0
  %545 = vmatpush1.bf16.msra.mxu0 0
  %546 = vmatprep.subr.bf16.mxu0 0
  %547 = vmatpush1.bf16.msra.mxu0 0
  %548 = vmatprep.subr.bf16.mxu0 0
  %549 = vmatpush1.bf16.msra.mxu0 0
  %550 = vmatprep.subr.bf16.mxu0 0
  %551 = vmatpush1.bf16.msra.mxu0 0
  %552 = vmatprep.subr.bf16.mxu0 0
  %553 = vmatpush1.bf16.msra.mxu0 0
  %554 = vmatprep.subr.bf16.mxu0 0
  %555 = vmatpush1.bf16.msra.mxu0 0
  %556 = vmatprep.subr.bf16.mxu0 0
  %557 = vmatpush1.bf16.msra.mxu0 0
  %558 = vmatprep.subr.bf16.mxu0 0
  %559 = vmatpush1.bf16.msra.mxu0 0
  %560 = vmatprep.mubr.bf16.mxu0 0
  %561 = vmatmul.mubr.bf16.gmra.mrb[0].mxu0 %v523
  %v562 = vpop.f32.mrb[0].mxu0
  %v563 = vadd.f32 0.0, %v562
  %v564 = vpop.f32.mrb[0].mxu0
  %v565 = vpop.f32.mrb[0].mxu0
  %v566 = vpop.f32.mrb[0].mxu0
  %567 = vdwg.mxu0
  %v568 = vadd.f32 %v527, %v563
  %v569 = vtanh.pop %v568
  %v570 = vpack.c.bf16 %v569, %v569
  %s571 = scalar_lea.vmem [#allocation3], 28
  %572 = vst [vmem:[%s571] sm:$0xf] %v570
  %573 = vst [vmem:[%s6] sm:$0xff] %v569
  %v574 = vld [vmem:[#allocation3] sm:$0x1]
  %v575 = vld [vmem:[#allocation3 + $0x4] sm:$0x1]
  %v576 = vld [vmem:[#allocation3 + $0x8] sm:$0x1]
  %v577 = vld [vmem:[#allocation3 + $0xc] sm:$0x1]
  %v578 = vld [vmem:[#allocation3 + $0x10] sm:$0x1]
  %v579 = vld [vmem:[#allocation3 + $0x14] sm:$0x1]
  %v580 = vld [vmem:[#allocation3 + $0x18] sm:$0x1]
  %v581 = vld [vmem:[#allocation3 + $0x1c] sm:$0x1]
  %v590 = vunpack.c.l.b16 %v574
  %v591 = vunpack.c.l.b16 %v575
  %v592 = vunpack.c.l.b16 %v576
  %v593 = vunpack.c.l.b16 %v577
  %v594 = vunpack.c.l.b16 %v578
  %v595 = vunpack.c.l.b16 %v579
  %v596 = vunpack.c.l.b16 %v580
  %v597 = vunpack.c.l.b16 %v581
  %v598 = vrot.slane %v591, 7
  %vm599 = vcmask 1041409
  %v600 = vsel %vm599, %v598, %v590
  %v601 = vrot.slane %v592, 6
  %vm602 = vcmask 1042434
  %v603 = vsel %vm602, %v601, %v600
  %v604 = vrot.slane %v593, 5
  %vm605 = vcmask 1043459
  %v606 = vsel %vm605, %v604, %v603
  %v607 = vrot.slane %v594, 4
  %vm608 = vcmask 1044484
  %v609 = vsel %vm608, %v607, %v606
  %v610 = vrot.slane %v595, 3
  %vm611 = vcmask 1045509
  %v612 = vsel %vm611, %v610, %v609
  %v613 = vrot.slane %v596, 2
  %vm614 = vcmask 1046534
  %v615 = vsel %vm614, %v613, %v612
  %v616 = vrot.slane %v597, 1
  %vm617 = vcmask 1047559
  %v618 = vsel %vm617, %v616, %v615
  %v619 = vpack.c.b16 %v618, %v618
  %621 = vst [vmem:[%s5] sm:$0xf] %v619
  %v622 = vld [vmem:[#allocation3] sm:$0x1]
  %v623 = vld [vmem:[#allocation3 + $0x4] sm:$0x1]
  %v624 = vld [vmem:[#allocation3 + $0x8] sm:$0x1]
  %v625 = vld [vmem:[#allocation3 + $0xc] sm:$0x1]
  %v626 = vld [vmem:[#allocation3 + $0x10] sm:$0x1]
  %v627 = vld [vmem:[#allocation3 + $0x14] sm:$0x1]
  %v628 = vld [vmem:[#allocation3 + $0x18] sm:$0x1]
  %v629 = vld [vmem:[#allocation3 + $0x1c] sm:$0x1]
  %v638 = vunpack.c.l.b16 %v622
  %v639 = vunpack.c.l.b16 %v623
  %v640 = vunpack.c.l.b16 %v624
  %v641 = vunpack.c.l.b16 %v625
  %v642 = vunpack.c.l.b16 %v626
  %v643 = vunpack.c.l.b16 %v627
  %v644 = vunpack.c.l.b16 %v628
  %v645 = vunpack.c.l.b16 %v629
  %v646 = vrot.slane %v638, 1
  %v647 = vsel %vm599, %v639, %v646
  %v648 = vrot.slane %v640, 7
  %v649 = vsel %vm602, %v648, %v647
  %v650 = vrot.slane %v641, 6
  %v651 = vsel %vm605, %v650, %v649
  %v652 = vrot.slane %v642, 5
  %v653 = vsel %vm608, %v652, %v651
  %v654 = vrot.slane %v643, 4
  %v655 = vsel %vm611, %v654, %v653
  %v656 = vrot.slane %v644, 3
  %v657 = vsel %vm614, %v656, %v655
  %v658 = vrot.slane %v645, 2
  %v659 = vsel %vm617, %v658, %v657
  %v660 = vpack.c.b16 %v659, %v659
  %662 = vst [vmem:[%s5 + $0x4] sm:$0xf] %v660
  %v663 = vld [vmem:[#allocation3] sm:$0x2]
  %v664 = vld [vmem:[#allocation3 + $0x4] sm:$0x2]
  %v665 = vld [vmem:[#allocation3 + $0x8] sm:$0x2]
  %v666 = vld [vmem:[#allocation3 + $0xc] sm:$0x2]
  %v667 = vld [vmem:[#allocation3 + $0x10] sm:$0x2]
  %v668 = vld [vmem:[#allocation3 + $0x14] sm:$0x2]
  %v669 = vld [vmem:[#allocation3 + $0x18] sm:$0x2]
  %v670 = vld [vmem:[#allocation3 + $0x1c] sm:$0x2]
  %v679 = vunpack.c.l.b16 %v663
  %v680 = vunpack.c.l.b16 %v664
  %v681 = vunpack.c.l.b16 %v665
  %v682 = vunpack.c.l.b16 %v666
  %v683 = vunpack.c.l.b16 %v667
  %v684 = vunpack.c.l.b16 %v668
  %v685 = vunpack.c.l.b16 %v669
  %v686 = vunpack.c.l.b16 %v670
  %v687 = vrot.slane %v679, 2
  %v688 = vrot.slane %v680, 1
  %v689 = vsel %vm599, %v688, %v687
  %v690 = vsel %vm602, %v681, %v689
  %v691 = vrot.slane %v682, 7
  %v692 = vsel %vm605, %v691, %v690
  %v693 = vrot.slane %v683, 6
  %v694 = vsel %vm608, %v693, %v692
  %v695 = vrot.slane %v684, 5
  %v696 = vsel %vm611, %v695, %v694
  %v697 = vrot.slane %v685, 4
  %v698 = vsel %vm614, %v697, %v696
  %v699 = vrot.slane %v686, 3
  %v700 = vsel %vm617, %v699, %v698
  %v701 = vpack.c.b16 %v700, %v700
  %703 = vst [vmem:[%s5 + $0x8] sm:$0xf] %v701
  %v704 = vld [vmem:[#allocation3] sm:$0x2]
  %v705 = vld [vmem:[#allocation3 + $0x4] sm:$0x2]
  %v706 = vld [vmem:[#allocation3 + $0x8] sm:$0x2]
  %v707 = vld [vmem:[#allocation3 + $0xc] sm:$0x2]
  %v708 = vld [vmem:[#allocation3 + $0x10] sm:$0x2]
  %v709 = vld [vmem:[#allocation3 + $0x14] sm:$0x2]
  %v710 = vld [vmem:[#allocation3 + $0x18] sm:$0x2]
  %v711 = vld [vmem:[#allocation3 + $0x1c] sm:$0x2]
  %v720 = vunpack.c.l.b16 %v704
  %v721 = vunpack.c.l.b16 %v705
  %v722 = vunpack.c.l.b16 %v706
  %v723 = vunpack.c.l.b16 %v707
  %v724 = vunpack.c.l.b16 %v708
  %v725 = vunpack.c.l.b16 %v709
  %v726 = vunpack.c.l.b16 %v710
  %v727 = vunpack.c.l.b16 %v711
  %v728 = vrot.slane %v720, 3
  %v729 = vrot.slane %v721, 2
  %v730 = vsel %vm599, %v729, %v728
  %v731 = vrot.slane %v722, 1
  %v732 = vsel %vm602, %v731, %v730
  %v733 = vsel %vm605, %v723, %v732
  %v734 = vrot.slane %v724, 7
  %v735 = vsel %vm608, %v734, %v733
  %v736 = vrot.slane %v725, 6
  %v737 = vsel %vm611, %v736, %v735
  %v738 = vrot.slane %v726, 5
  %v739 = vsel %vm614, %v738, %v737
  %v740 = vrot.slane %v727, 4
  %v741 = vsel %vm617, %v740, %v739
  %v742 = vpack.c.b16 %v741, %v741
  %744 = vst [vmem:[%s5 + $0xc] sm:$0xf] %v742
  %v745 = vld [vmem:[#allocation3] sm:$0x4]
  %v746 = vld [vmem:[#allocation3 + $0x4] sm:$0x4]
  %v747 = vld [vmem:[#allocation3 + $0x8] sm:$0x4]
  %v748 = vld [vmem:[#allocation3 + $0xc] sm:$0x4]
  %v749 = vld [vmem:[#allocation3 + $0x10] sm:$0x4]
  %v750 = vld [vmem:[#allocation3 + $0x14] sm:$0x4]
  %v751 = vld [vmem:[#allocation3 + $0x18] sm:$0x4]
  %v752 = vld [vmem:[#allocation3 + $0x1c] sm:$0x4]
  %v761 = vunpack.c.l.b16 %v745
  %v762 = vunpack.c.l.b16 %v746
  %v763 = vunpack.c.l.b16 %v747
  %v764 = vunpack.c.l.b16 %v748
  %v765 = vunpack.c.l.b16 %v749
  %v766 = vunpack.c.l.b16 %v750
  %v767 = vunpack.c.l.b16 %v751
  %v768 = vunpack.c.l.b16 %v752
  %v769 = vrot.slane %v761, 4
  %v770 = vrot.slane %v762, 3
  %v771 = vsel %vm599, %v770, %v769
  %v772 = vrot.slane %v763, 2
  %v773 = vsel %vm602, %v772, %v771
  %v774 = vrot.slane %v764, 1
  %v775 = vsel %vm605, %v774, %v773
  %v776 = vsel %vm608, %v765, %v775
  %v777 = vrot.slane %v766, 7
  %v778 = vsel %vm611, %v777, %v776
  %v779 = vrot.slane %v767, 6
  %v780 = vsel %vm614, %v779, %v778
  %v781 = vrot.slane %v768, 5
  %v782 = vsel %vm617, %v781, %v780
  %v783 = vpack.c.b16 %v782, %v782
  %785 = vst [vmem:[%s5 + $0x10] sm:$0xf] %v783
  %v786 = vld [vmem:[#allocation3] sm:$0x4]
  %v787 = vld [vmem:[#allocation3 + $0x4] sm:$0x4]
  %v788 = vld [vmem:[#allocation3 + $0x8] sm:$0x4]
  %v789 = vld [vmem:[#allocation3 + $0xc] sm:$0x4]
  %v790 = vld [vmem:[#allocation3 + $0x10] sm:$0x4]
  %v791 = vld [vmem:[#allocation3 + $0x14] sm:$0x4]
  %v792 = vld [vmem:[#allocation3 + $0x18] sm:$0x4]
  %v793 = vld [vmem:[#allocation3 + $0x1c] sm:$0x4]
  %v802 = vunpack.c.l.b16 %v786
  %v803 = vunpack.c.l.b16 %v787
  %v804 = vunpack.c.l.b16 %v788
  %v805 = vunpack.c.l.b16 %v789
  %v806 = vunpack.c.l.b16 %v790
  %v807 = vunpack.c.l.b16 %v791
  %v808 = vunpack.c.l.b16 %v792
  %v809 = vunpack.c.l.b16 %v793
  %v810 = vrot.slane %v802, 5
  %v811 = vrot.slane %v803, 4
  %v812 = vsel %vm599, %v811, %v810
  %v813 = vrot.slane %v804, 3
  %v814 = vsel %vm602, %v813, %v812
  %v815 = vrot.slane %v805, 2
  %v816 = vsel %vm605, %v815, %v814
  %v817 = vrot.slane %v806, 1
  %v818 = vsel %vm608, %v817, %v816
  %v819 = vsel %vm611, %v807, %v818
  %v820 = vrot.slane %v808, 7
  %v821 = vsel %vm614, %v820, %v819
  %v822 = vrot.slane %v809, 6
  %v823 = vsel %vm617, %v822, %v821
  %v824 = vpack.c.b16 %v823, %v823
  %826 = vst [vmem:[%s5 + $0x14] sm:$0xf] %v824
  %v827 = vld [vmem:[#allocation3] sm:$0x8]
  %v828 = vld [vmem:[#allocation3 + $0x4] sm:$0x8]
  %v829 = vld [vmem:[#allocation3 + $0x8] sm:$0x8]
  %v830 = vld [vmem:[#allocation3 + $0xc] sm:$0x8]
  %v831 = vld [vmem:[#allocation3 + $0x10] sm:$0x8]
  %v832 = vld [vmem:[#allocation3 + $0x14] sm:$0x8]
  %v833 = vld [vmem:[#allocation3 + $0x18] sm:$0x8]
  %v834 = vld [vmem:[#allocation3 + $0x1c] sm:$0x8]
  %v843 = vunpack.c.l.b16 %v827
  %v844 = vunpack.c.l.b16 %v828
  %v845 = vunpack.c.l.b16 %v829
  %v846 = vunpack.c.l.b16 %v830
  %v847 = vunpack.c.l.b16 %v831
  %v848 = vunpack.c.l.b16 %v832
  %v849 = vunpack.c.l.b16 %v833
  %v850 = vunpack.c.l.b16 %v834
  %v851 = vrot.slane %v843, 6
  %v852 = vrot.slane %v844, 5
  %v853 = vsel %vm599, %v852, %v851
  %v854 = vrot.slane %v845, 4
  %v855 = vsel %vm602, %v854, %v853
  %v856 = vrot.slane %v846, 3
  %v857 = vsel %vm605, %v856, %v855
  %v858 = vrot.slane %v847, 2
  %v859 = vsel %vm608, %v858, %v857
  %v860 = vrot.slane %v848, 1
  %v861 = vsel %vm611, %v860, %v859
  %v862 = vsel %vm614, %v849, %v861
  %v863 = vrot.slane %v850, 7
  %v864 = vsel %vm617, %v863, %v862
  %v865 = vpack.c.b16 %v864, %v864
  %867 = vst [vmem:[%s5 + $0x18] sm:$0xf] %v865
  %v868 = vld [vmem:[#allocation3] sm:$0x8]
  %v869 = vld [vmem:[#allocation3 + $0x4] sm:$0x8]
  %v870 = vld [vmem:[#allocation3 + $0x8] sm:$0x8]
  %v871 = vld [vmem:[#allocation3 + $0xc] sm:$0x8]
  %v872 = vld [vmem:[#allocation3 + $0x10] sm:$0x8]
  %v873 = vld [vmem:[#allocation3 + $0x14] sm:$0x8]
  %v874 = vld [vmem:[#allocation3 + $0x18] sm:$0x8]
  %v875 = vld [vmem:[#allocation3 + $0x1c] sm:$0x8]
  %v884 = vunpack.c.l.b16 %v868
  %v885 = vunpack.c.l.b16 %v869
  %v886 = vunpack.c.l.b16 %v870
  %v887 = vunpack.c.l.b16 %v871
  %v888 = vunpack.c.l.b16 %v872
  %v889 = vunpack.c.l.b16 %v873
  %v890 = vunpack.c.l.b16 %v874
  %v891 = vunpack.c.l.b16 %v875
  %v892 = vrot.slane %v884, 7
  %v893 = vrot.slane %v885, 6
  %v894 = vsel %vm599, %v893, %v892
  %v895 = vrot.slane %v886, 5
  %v896 = vsel %vm602, %v895, %v894
  %v897 = vrot.slane %v887, 4
  %v898 = vsel %vm605, %v897, %v896
  %v899 = vrot.slane %v888, 3
  %v900 = vsel %vm608, %v899, %v898
  %v901 = vrot.slane %v889, 2
  %v902 = vsel %vm611, %v901, %v900
  %v903 = vrot.slane %v890, 1
  %v904 = vsel %vm614, %v903, %v902
  %v905 = vsel %vm617, %v891, %v904
  %v906 = vpack.c.b16 %v905, %v905
  %908 = vst [vmem:[%s5 + $0x1c] sm:$0xf] %v906
  // Predicated region
  $region22: #{rnnlm_forward.2} parent=0 // pred_check
    _
  $region23: #{rnnlm_forward.2} parent=0 // pred_check_branch
    %910 = sbr.rel (0) target = $region25
  $region24: #{rnnlm_forward.2} parent=0 // pred_region
    _
  $region25: #{rnnlm_forward.2} parent=0 // pred_fallthru
    _
  // Predicated region
  $region26: #{rnnlm_forward.2} parent=0 // pred_check
    _
  $region27: #{rnnlm_forward.2} parent=0 // pred_check_branch
    %912 = sbr.rel (0) target = $region29
  $region28: #{rnnlm_forward.2} parent=0 // pred_region
    _
  $region29: #{rnnlm_forward.2} parent=0 // pred_fallthru
    _
  // Predicated region
  $region30: #{rnnlm_forward.2} parent=0 // pred_check
    _
  $region31: #{rnnlm_forward.2} parent=0 // pred_check_branch
    %914 = sbr.rel (0) target = $region33
  $region32: #{rnnlm_forward.2} parent=0 // pred_region
    _
  $region33: #{rnnlm_forward.2} parent=0 // pred_fallthru
    _
  // Predicated region
  $region34: #{rnnlm_forward.2} parent=0 // pred_check
    _
  $region35: #{rnnlm_forward.2} parent=0 // pred_check_branch
    %916 = sbr.rel (0) target = $region37
  $region36: #{rnnlm_forward.2} parent=0 // pred_region
    _
  $region37: #{rnnlm_forward.2} parent=0 // pred_fallthru
    _

</llo_original>
